<compile_context>
chip_gen: v7x
topology: tpu7x:2x2x1
jax: 0.10.0
libtpu: 0.0.40
codegen_flags: <defaults>
</compile_context>

<pallas_src>
import numpy as np
import jax
import jax.numpy as jnp
from jax.experimental import pallas as pl
from jax.experimental.pallas import tpu as pltpu


# ---------------------------------------------------------------------------
# Pallas kernel: one (H, W) real slice -> masked centered FFT / iFFT, real part
# ---------------------------------------------------------------------------
def _fft_mask_forback_kernel(x_ref, mask_ref,
                             fhr_ref, fhi_ref, fwtr_ref, fwti_ref,
                             ihr_ref, ihi_ref, iwtr_ref, iwti_ref,
                             out_ref):
    x = x_ref[0]                 # (H, W) real image slice
    mask = mask_ref[...]         # (H, W) real k-space mask

    dot = lambda a, b: jnp.dot(a, b, preferred_element_type=jnp.float32)

    # --- forward centered 2D DFT:  K = C_H @ x @ C_W^T   (x is real) --------
    t_re = dot(fhr_ref[...], x)
    t_im = dot(fhi_ref[...], x)
    k_re = dot(t_re, fwtr_ref[...]) - dot(t_im, fwti_ref[...])
    k_im = dot(t_re, fwti_ref[...]) + dot(t_im, fwtr_ref[...])

    # --- k-space mask (real, broadcast over re/im) ---------------------------
    k_re = k_re * mask
    k_im = k_im * mask

    # --- inverse centered 2D DFT, real part:  out = Re(D_H @ K @ D_W^T) -----
    u_re = dot(ihr_ref[...], k_re) - dot(ihi_ref[...], k_im)
    u_im = dot(ihr_ref[...], k_im) + dot(ihi_ref[...], k_re)
    out_ref[0] = dot(u_re, iwtr_ref[...]) - dot(u_im, iwti_ref[...])


# ---------------------------------------------------------------------------
# centered DFT matrices (built in float64 numpy, passed to the kernel as f32)
# ---------------------------------------------------------------------------
def _centered_dft_mats(n, inverse=False):
    """C such that C @ v == fftshift(fft(ifftshift(v)))  (or ifft if inverse)."""
    eye = np.eye(n, dtype=np.complex128)
    y = np.fft.ifftshift(eye, axes=0)
    y = np.fft.ifft(y, axis=0) if inverse else np.fft.fft(y, axis=0)
    c = np.fft.fftshift(y, axes=0)
    return (jnp.asarray(c.real, jnp.float32), jnp.asarray(c.imag, jnp.float32))


# ---------------------------------------------------------------------------
# public wrapper: FFT_Mask_ForBack.forward
# ---------------------------------------------------------------------------
def fft_mask_forback(x, full_mask, sigma=0.1, add_noise=True, key=None):
    """x: (N, C, H, W) float32; full_mask: (H, W, 2) (only [..., 0] used)."""
    N, C, H, W = x.shape
    x = x.astype(jnp.float32)
    mask = full_mask[..., 0].astype(jnp.float32)                   # (H, W)

    if add_noise:
        if key is None:
            key = jax.random.PRNGKey(0)
        # torch: noise = randn_like(x) * sigma * max(x); k += fft2(noise)
        # fft2 is linear -> fft2(x) + fft2(noise) == fft2(x + noise).
        # TODO(synk): noise uses jax.random (different stream than torch RNG).
        noise = jax.random.normal(key, x.shape, jnp.float32) * (sigma * jnp.max(x))
        x = x + noise

    fhr, fhi = _centered_dft_mats(H, inverse=False)                # (H, H)
    fwr, fwi = _centered_dft_mats(W, inverse=False)                # (W, W)
    ihr, ihi = _centered_dft_mats(H, inverse=True)
    iwr, iwi = _centered_dft_mats(W, inverse=True)
    # pre-transpose the right-hand ("width") matrices -> no in-kernel transposes
    fwtr, fwti = fwr.T, fwi.T
    iwtr, iwti = iwr.T, iwi.T

    B = N * C
    xb = x.reshape(B, H, W)          # fold batch*channel into one grid axis

    img_spec = pl.BlockSpec((1, H, W), lambda b: (b, 0, 0))
    hw_spec = pl.BlockSpec((H, W), lambda b: (0, 0))
    hh_spec = pl.BlockSpec((H, H), lambda b: (0, 0))
    ww_spec = pl.BlockSpec((W, W), lambda b: (0, 0))

    out = pl.pallas_call(
        _fft_mask_forback_kernel,
        out_shape=jax.ShapeDtypeStruct((B, H, W), jnp.float32),
        grid=(B,),
        in_specs=[
            img_spec,                 # x slice
            hw_spec,                  # mask
            hh_spec, hh_spec,         # forward DFT (rows): re, im
            ww_spec, ww_spec,         # forward DFT (cols, transposed): re, im
            hh_spec, hh_spec,         # inverse DFT (rows): re, im
            ww_spec, ww_spec,         # inverse DFT (cols, transposed): re, im
        ],
        out_specs=img_spec,
        compiler_params=pltpu.CompilerParams(
            dimension_semantics=("parallel",)),
    )(xb, mask, fhr, fhi, fwtr, fwti, ihr, ihi, iwtr, iwti)

    return out.reshape(N, C, H, W)


# ---------------------------------------------------------------------------
# pure-JAX reference (jnp.fft with centered shifts) for correctness checking
# ---------------------------------------------------------------------------
def _ref_forward(x, full_mask, noise):
    mask = full_mask[..., 0]
    ax = (-2, -1)
    # torch's fft2/ifft2 helpers shift over ALL dims, but the batch/channel
    # shifts cancel exactly around per-slice FFTs and the broadcast mask, so
    # shifting only the spatial axes is equivalent.
    fft2c = lambda d: jnp.fft.fftshift(
        jnp.fft.fft2(jnp.fft.ifftshift(d, axes=ax), axes=ax), axes=ax)
    ifft2c = lambda d: jnp.fft.fftshift(
        jnp.fft.ifft2(jnp.fft.ifftshift(d, axes=ax), axes=ax), axes=ax)

    k = fft2c(x.astype(jnp.complex64))
    if noise is not None:
        k = k + fft2c(noise.astype(jnp.complex64))
    k = k * mask[None, None].astype(jnp.complex64)
    return jnp.real(ifft2c(k)).astype(jnp.float32)


if __name__ == "__main__":
    key = jax.random.PRNGKey(0)
    kx, km, kn = jax.random.split(key, 3)

    N, C, H, W = 2, 1, 16, 16
    sigma = 0.1

    x = jax.random.normal(kx, (N, C, H, W), dtype=jnp.float32)
    # random undersampling mask; trailing size-2 dim as expected by [..., 0]
    m2d = (jax.random.uniform(km, (H, W)) > 0.5).astype(jnp.float32)
    full_mask = jnp.stack([m2d, m2d], axis=-1)                     # (H, W, 2)

    out = fft_mask_forback(x, full_mask, sigma=sigma, add_noise=True, key=kn)
    out = jax.block_until_ready(out)

    # reference with the exact same noise realization
    noise = jax.random.normal(kn, x.shape, jnp.float32) * (sigma * jnp.max(x))
    ref = jax.block_until_ready(_ref_forward(x, full_mask, noise))

    assert out.shape == (N, C, H, W)
    err = float(jnp.max(jnp.abs(out - ref)))
    assert err < 1e-3, f"mismatch vs JAX reference: {err}"

    print("KERNEL_OK")
</pallas_src>

<mosaic_0001>
module attributes {stable_mosaic.version = 11 : i64} {
  func.func @_fft_mask_forback_kernel(%arg0: i32, %arg1: memref<1x16x16xf32, #tpu.memory_space<vmem>>, %arg2: memref<16x16xf32, #tpu.memory_space<vmem>>, %arg3: memref<16x16xf32, #tpu.memory_space<vmem>>, %arg4: memref<16x16xf32, #tpu.memory_space<vmem>>, %arg5: memref<16x16xf32, #tpu.memory_space<vmem>>, %arg6: memref<16x16xf32, #tpu.memory_space<vmem>>, %arg7: memref<16x16xf32, #tpu.memory_space<vmem>>, %arg8: memref<16x16xf32, #tpu.memory_space<vmem>>, %arg9: memref<16x16xf32, #tpu.memory_space<vmem>>, %arg10: memref<16x16xf32, #tpu.memory_space<vmem>>, %arg11: memref<1x16x16xf32, #tpu.memory_space<vmem>>) attributes {dimension_semantics = [#tpu.dimension_semantics<parallel>], iteration_bounds = array<i64: 2>, scalar_prefetch = 0 : i64, scratch_operands = 0 : i64, tpu.core_type = #tpu.core_type<tc>, window_params = [{transform_indices = @transform_0, window_bounds = array<i64: 1, 16, 16>}, {pipeline_mode = #tpu.pipeline_mode<synchronous>, transform_indices = @transform_1, window_bounds = array<i64: 16, 16>}, {pipeline_mode = #tpu.pipeline_mode<synchronous>, transform_indices = @transform_2, window_bounds = array<i64: 16, 16>}, {pipeline_mode = #tpu.pipeline_mode<synchronous>, transform_indices = @transform_3, window_bounds = array<i64: 16, 16>}, {pipeline_mode = #tpu.pipeline_mode<synchronous>, transform_indices = @transform_4, window_bounds = array<i64: 16, 16>}, {pipeline_mode = #tpu.pipeline_mode<synchronous>, transform_indices = @transform_5, window_bounds = array<i64: 16, 16>}, {pipeline_mode = #tpu.pipeline_mode<synchronous>, transform_indices = @transform_6, window_bounds = array<i64: 16, 16>}, {pipeline_mode = #tpu.pipeline_mode<synchronous>, transform_indices = @transform_7, window_bounds = array<i64: 16, 16>}, {pipeline_mode = #tpu.pipeline_mode<synchronous>, transform_indices = @transform_8, window_bounds = array<i64: 16, 16>}, {pipeline_mode = #tpu.pipeline_mode<synchronous>, transform_indices = @transform_9, window_bounds = array<i64: 16, 16>}, {transform_indices = @transform_10, window_bounds = array<i64: 1, 16, 16>}]} {
    %c0 = arith.constant 0 : index
    %c0_0 = arith.constant 0 : index
    %c0_1 = arith.constant 0 : index
    %0 = vector.load %arg1[%c0, %c0_0, %c0_1] : memref<1x16x16xf32, #tpu.memory_space<vmem>>, vector<1x16x16xf32>
    %1 = vector.shape_cast %0 : vector<1x16x16xf32> to vector<16x16xf32>
    %c0_2 = arith.constant 0 : index
    %c0_3 = arith.constant 0 : index
    %2 = vector.load %arg2[%c0_2, %c0_3] : memref<16x16xf32, #tpu.memory_space<vmem>>, vector<16x16xf32>
    %c0_4 = arith.constant 0 : index
    %c0_5 = arith.constant 0 : index
    %3 = vector.load %arg3[%c0_4, %c0_5] : memref<16x16xf32, #tpu.memory_space<vmem>>, vector<16x16xf32>
    %cst = arith.constant dense<0.000000e+00> : vector<16x16xf32>
    %4 = tpu.matmul %3, %1, %cst {dimension_numbers = #tpu.dot_dimension_numbers<[1], [0], [0], [1], [0, 0, 1, 1], [], []>} : vector<16x16xf32>, vector<16x16xf32>, vector<16x16xf32> -> vector<16x16xf32>
    %c0_6 = arith.constant 0 : index
    %c0_7 = arith.constant 0 : index
    %5 = vector.load %arg4[%c0_6, %c0_7] : memref<16x16xf32, #tpu.memory_space<vmem>>, vector<16x16xf32>
    %cst_8 = arith.constant dense<0.000000e+00> : vector<16x16xf32>
    %6 = tpu.matmul %5, %1, %cst_8 {dimension_numbers = #tpu.dot_dimension_numbers<[1], [0], [0], [1], [0, 0, 1, 1], [], []>} : vector<16x16xf32>, vector<16x16xf32>, vector<16x16xf32> -> vector<16x16xf32>
    %c0_9 = arith.constant 0 : index
    %c0_10 = arith.constant 0 : index
    %7 = vector.load %arg5[%c0_9, %c0_10] : memref<16x16xf32, #tpu.memory_space<vmem>>, vector<16x16xf32>
    %cst_11 = arith.constant dense<0.000000e+00> : vector<16x16xf32>
    %8 = tpu.matmul %4, %7, %cst_11 {dimension_numbers = #tpu.dot_dimension_numbers<[1], [0], [0], [1], [0, 0, 1, 1], [], []>} : vector<16x16xf32>, vector<16x16xf32>, vector<16x16xf32> -> vector<16x16xf32>
    %c0_12 = arith.constant 0 : index
    %c0_13 = arith.constant 0 : index
    %9 = vector.load %arg6[%c0_12, %c0_13] : memref<16x16xf32, #tpu.memory_space<vmem>>, vector<16x16xf32>
    %cst_14 = arith.constant dense<0.000000e+00> : vector<16x16xf32>
    %10 = tpu.matmul %6, %9, %cst_14 {dimension_numbers = #tpu.dot_dimension_numbers<[1], [0], [0], [1], [0, 0, 1, 1], [], []>} : vector<16x16xf32>, vector<16x16xf32>, vector<16x16xf32> -> vector<16x16xf32>
    %11 = arith.subf %8, %10 : vector<16x16xf32>
    %c0_15 = arith.constant 0 : index
    %c0_16 = arith.constant 0 : index
    %12 = vector.load %arg6[%c0_15, %c0_16] : memref<16x16xf32, #tpu.memory_space<vmem>>, vector<16x16xf32>
    %cst_17 = arith.constant dense<0.000000e+00> : vector<16x16xf32>
    %13 = tpu.matmul %4, %12, %cst_17 {dimension_numbers = #tpu.dot_dimension_numbers<[1], [0], [0], [1], [0, 0, 1, 1], [], []>} : vector<16x16xf32>, vector<16x16xf32>, vector<16x16xf32> -> vector<16x16xf32>
    %c0_18 = arith.constant 0 : index
    %c0_19 = arith.constant 0 : index
    %14 = vector.load %arg5[%c0_18, %c0_19] : memref<16x16xf32, #tpu.memory_space<vmem>>, vector<16x16xf32>
    %cst_20 = arith.constant dense<0.000000e+00> : vector<16x16xf32>
    %15 = tpu.matmul %6, %14, %cst_20 {dimension_numbers = #tpu.dot_dimension_numbers<[1], [0], [0], [1], [0, 0, 1, 1], [], []>} : vector<16x16xf32>, vector<16x16xf32>, vector<16x16xf32> -> vector<16x16xf32>
    %16 = arith.addf %13, %15 : vector<16x16xf32>
    %17 = arith.mulf %11, %2 : vector<16x16xf32>
    %18 = arith.mulf %16, %2 : vector<16x16xf32>
    %c0_21 = arith.constant 0 : index
    %c0_22 = arith.constant 0 : index
    %19 = vector.load %arg7[%c0_21, %c0_22] : memref<16x16xf32, #tpu.memory_space<vmem>>, vector<16x16xf32>
    %cst_23 = arith.constant dense<0.000000e+00> : vector<16x16xf32>
    %20 = tpu.matmul %19, %17, %cst_23 {dimension_numbers = #tpu.dot_dimension_numbers<[1], [0], [0], [1], [0, 0, 1, 1], [], []>} : vector<16x16xf32>, vector<16x16xf32>, vector<16x16xf32> -> vector<16x16xf32>
    %c0_24 = arith.constant 0 : index
    %c0_25 = arith.constant 0 : index
    %21 = vector.load %arg8[%c0_24, %c0_25] : memref<16x16xf32, #tpu.memory_space<vmem>>, vector<16x16xf32>
    %cst_26 = arith.constant dense<0.000000e+00> : vector<16x16xf32>
    %22 = tpu.matmul %21, %18, %cst_26 {dimension_numbers = #tpu.dot_dimension_numbers<[1], [0], [0], [1], [0, 0, 1, 1], [], []>} : vector<16x16xf32>, vector<16x16xf32>, vector<16x16xf32> -> vector<16x16xf32>
    %23 = arith.subf %20, %22 : vector<16x16xf32>
    %c0_27 = arith.constant 0 : index
    %c0_28 = arith.constant 0 : index
    %24 = vector.load %arg7[%c0_27, %c0_28] : memref<16x16xf32, #tpu.memory_space<vmem>>, vector<16x16xf32>
    %cst_29 = arith.constant dense<0.000000e+00> : vector<16x16xf32>
    %25 = tpu.matmul %24, %18, %cst_29 {dimension_numbers = #tpu.dot_dimension_numbers<[1], [0], [0], [1], [0, 0, 1, 1], [], []>} : vector<16x16xf32>, vector<16x16xf32>, vector<16x16xf32> -> vector<16x16xf32>
    %c0_30 = arith.constant 0 : index
    %c0_31 = arith.constant 0 : index
    %26 = vector.load %arg8[%c0_30, %c0_31] : memref<16x16xf32, #tpu.memory_space<vmem>>, vector<16x16xf32>
    %cst_32 = arith.constant dense<0.000000e+00> : vector<16x16xf32>
    %27 = tpu.matmul %26, %17, %cst_32 {dimension_numbers = #tpu.dot_dimension_numbers<[1], [0], [0], [1], [0, 0, 1, 1], [], []>} : vector<16x16xf32>, vector<16x16xf32>, vector<16x16xf32> -> vector<16x16xf32>
    %28 = arith.addf %25, %27 : vector<16x16xf32>
    %c0_33 = arith.constant 0 : index
    %c0_34 = arith.constant 0 : index
    %29 = vector.load %arg9[%c0_33, %c0_34] : memref<16x16xf32, #tpu.memory_space<vmem>>, vector<16x16xf32>
    %cst_35 = arith.constant dense<0.000000e+00> : vector<16x16xf32>
    %30 = tpu.matmul %23, %29, %cst_35 {dimension_numbers = #tpu.dot_dimension_numbers<[1], [0], [0], [1], [0, 0, 1, 1], [], []>} : vector<16x16xf32>, vector<16x16xf32>, vector<16x16xf32> -> vector<16x16xf32>
    %c0_36 = arith.constant 0 : index
    %c0_37 = arith.constant 0 : index
    %31 = vector.load %arg10[%c0_36, %c0_37] : memref<16x16xf32, #tpu.memory_space<vmem>>, vector<16x16xf32>
    %cst_38 = arith.constant dense<0.000000e+00> : vector<16x16xf32>
    %32 = tpu.matmul %28, %31, %cst_38 {dimension_numbers = #tpu.dot_dimension_numbers<[1], [0], [0], [1], [0, 0, 1, 1], [], []>} : vector<16x16xf32>, vector<16x16xf32>, vector<16x16xf32> -> vector<16x16xf32>
    %33 = arith.subf %30, %32 : vector<16x16xf32>
    %c0_39 = arith.constant 0 : index
    %c0_40 = arith.constant 0 : index
    %c0_41 = arith.constant 0 : index
    %34 = vector.load %arg11[%c0_39, %c0_40, %c0_41] : memref<1x16x16xf32, #tpu.memory_space<vmem>>, vector<1x16x16xf32>
    %35 = vector.shape_cast %34 : vector<1x16x16xf32> to vector<16x16xf32>
    %36 = vector.shape_cast %33 : vector<16x16xf32> to vector<1x16x16xf32>
    tpu.vector_store %arg11[%c0_39, %c0_40, %c0_41], %36 {strides = array<i32>} : memref<1x16x16xf32, #tpu.memory_space<vmem>>, vector<1x16x16xf32>,
    return
  }
  func.func @transform_0(%arg0: i32) -> (i32, i32, i32) {
    %c0_i32 = arith.constant 0 : i32
    %c0_i32_0 = arith.constant 0 : i32
    %c0_i32_1 = arith.constant 0 : i32
    return %arg0, %c0_i32, %c0_i32_0 : i32, i32, i32
  }
  func.func @transform_1(%arg0: i32) -> (i32, i32) {
    %c0_i32 = arith.constant 0 : i32
    %c0_i32_0 = arith.constant 0 : i32
    %c0_i32_1 = arith.constant 0 : i32
    return %c0_i32, %c0_i32_0 : i32, i32
  }
  func.func @transform_2(%arg0: i32) -> (i32, i32) {
    %c0_i32 = arith.constant 0 : i32
    %c0_i32_0 = arith.constant 0 : i32
    %c0_i32_1 = arith.constant 0 : i32
    return %c0_i32, %c0_i32_0 : i32, i32
  }
  func.func @transform_3(%arg0: i32) -> (i32, i32) {
    %c0_i32 = arith.constant 0 : i32
    %c0_i32_0 = arith.constant 0 : i32
    %c0_i32_1 = arith.constant 0 : i32
    return %c0_i32, %c0_i32_0 : i32, i32
  }
  func.func @transform_4(%arg0: i32) -> (i32, i32) {
    %c0_i32 = arith.constant 0 : i32
    %c0_i32_0 = arith.constant 0 : i32
    %c0_i32_1 = arith.constant 0 : i32
    return %c0_i32, %c0_i32_0 : i32, i32
  }
  func.func @transform_5(%arg0: i32) -> (i32, i32) {
    %c0_i32 = arith.constant 0 : i32
    %c0_i32_0 = arith.constant 0 : i32
    %c0_i32_1 = arith.constant 0 : i32
    return %c0_i32, %c0_i32_0 : i32, i32
  }
  func.func @transform_6(%arg0: i32) -> (i32, i32) {
    %c0_i32 = arith.constant 0 : i32
    %c0_i32_0 = arith.constant 0 : i32
    %c0_i32_1 = arith.constant 0 : i32
    return %c0_i32, %c0_i32_0 : i32, i32
  }
  func.func @transform_7(%arg0: i32) -> (i32, i32) {
    %c0_i32 = arith.constant 0 : i32
    %c0_i32_0 = arith.constant 0 : i32
    %c0_i32_1 = arith.constant 0 : i32
    return %c0_i32, %c0_i32_0 : i32, i32
  }
  func.func @transform_8(%arg0: i32) -> (i32, i32) {
    %c0_i32 = arith.constant 0 : i32
    %c0_i32_0 = arith.constant 0 : i32
    %c0_i32_1 = arith.constant 0 : i32
    return %c0_i32, %c0_i32_0 : i32, i32
  }
  func.func @transform_9(%arg0: i32) -> (i32, i32) {
    %c0_i32 = arith.constant 0 : i32
    %c0_i32_0 = arith.constant 0 : i32
    %c0_i32_1 = arith.constant 0 : i32
    return %c0_i32, %c0_i32_0 : i32, i32
  }
  func.func @transform_10(%arg0: i32) -> (i32, i32, i32) {
    %c0_i32 = arith.constant 0 : i32
    %c0_i32_0 = arith.constant 0 : i32
    %c0_i32_1 = arith.constant 0 : i32
    return %arg0, %c0_i32, %c0_i32_0 : i32, i32, i32
  }
}

</mosaic_0001>

<llo_original>
// kernel: tpu_custom_call.1
$region0: #{tpu_custom_call.1}
  #allocation0 [shape = 'u32[]', space=smem, size = 0x4, offset = 0x4, fixed_abs, tag = 'smem constant byte address 0x4 - core index']
  #allocation1 [shape = 'u32[144,128]{1,0:T(1,128)}', space=vmem, size = 0x12000, scoped, tag = 'internal scratch']
  %s0 = inlined_call_operand.hbm [shape: f32[2,16,16], index: 0, kind: input, shape index: {}]
  %s1 = inlined_call_operand.hbm [shape: f32[16,16], index: 1, kind: input, shape index: {}]
  %s2 = inlined_call_operand.hbm [shape: f32[16,16], index: 2, kind: input, shape index: {}]
  %s3 = inlined_call_operand.hbm [shape: f32[16,16], index: 3, kind: input, shape index: {}]
  %s4 = inlined_call_operand.hbm [shape: f32[16,16], index: 4, kind: input, shape index: {}]
  %s5 = inlined_call_operand.vmem [shape: f32[16,16], index: 5, kind: input, shape index: {}]
  %s6 = inlined_call_operand.hbm [shape: f32[16,16], index: 6, kind: input, shape index: {}]
  %s7 = inlined_call_operand.hbm [shape: f32[16,16], index: 7, kind: input, shape index: {}]
  %s8 = inlined_call_operand.hbm [shape: f32[16,16], index: 8, kind: input, shape index: {}]
  %s9 = inlined_call_operand.vmem [shape: f32[16,16], index: 9, kind: input, shape index: {}]
  %s10 = inlined_call_operand.hbm [shape: f32[2,16,16], index: 10, kind: output, shape index: {}]
  %s11 = sld [smem:[#allocation0]]
  $region105: #{tpu_custom_call.1} parent=0
    _
  %s13 = ssub.s32 1, %s11
  %s14 = scalar_select 0, %s13, %s11
  $region1: #{tpu_custom_call.1} parent=0
    #allocation2 [shape = 'u8[16384]{0}', space=vmem, size = 0x4000, scoped, tag = 'input window, operand 0']
    #allocation3 [shape = 's32[2]{0}', space=sflag, size = 0x8, scoped, tag = 'scoped memory for tpu_custom_call.1']
    #allocation4 [shape = 's32[2]{0}', space=sflag, size = 0x8, scoped, tag = 'scoped memory for tpu_custom_call.1']
    #allocation5 [shape = 'u8[8192]{0}', space=vmem, size = 0x2000, scoped, tag = 'input window, operand 1, single buffered']
    #allocation6 [shape = 's32[1]{0}', space=sflag, size = 0x4, scoped, tag = 'scoped memory for tpu_custom_call.1']
    #allocation7 [shape = 'u8[8192]{0}', space=vmem, size = 0x2000, scoped, tag = 'input window, operand 2, single buffered']
    #allocation8 [shape = 'u8[8192]{0}', space=vmem, size = 0x2000, scoped, tag = 'input window, operand 3, single buffered']
    #allocation9 [shape = 's32[1]{0}', space=sflag, size = 0x4, scoped, tag = 'scoped memory for tpu_custom_call.1']
    #allocation10 [shape = 'u8[8192]{0}', space=vmem, size = 0x2000, scoped, tag = 'input window, operand 4, single buffered']
    #allocation11 [shape = 'u8[8192]{0}', space=vmem, size = 0x2000, scoped, tag = 'input window, operand 6, single buffered']
    #allocation12 [shape = 's32[1]{0}', space=sflag, size = 0x4, scoped, tag = 'scoped memory for tpu_custom_call.1']
    #allocation13 [shape = 'u8[8192]{0}', space=vmem, size = 0x2000, scoped, tag = 'input window, operand 7, single buffered']
    #allocation14 [shape = 'u8[8192]{0}', space=vmem, size = 0x2000, scoped, tag = 'input window, operand 8, single buffered']
    #allocation15 [shape = 's32[1]{0}', space=sflag, size = 0x4, scoped, tag = 'scoped memory for tpu_custom_call.1']
    #allocation16 [shape = 'u8[16384]{0}', space=vmem, size = 0x4000, scoped, tag = 'output window, operand 0']
    %15 = vsyncpa [#allocation3], 0
    %s16 = scalar_lea.sflag [#allocation3], 1
    %17 = vsyncpa %s16, 0
    %18 = vsyncpa [#allocation6], 0
    %19 = vsyncpa [#allocation9], 0
    %20 = vsyncpa [#allocation12], 0
    %21 = vsyncpa [#allocation15], 0
    %22 = vsyncpa [#allocation4], 0
    %s23 = scalar_lea.sflag [#allocation4], 1
    %24 = vsyncpa %s23, 0
    loop: start=0, step=1, limit=4
    $region2: #{tpu_custom_call.1} parent=1 // loop_pre_header
      _
    $region3: #{tpu_custom_call.1} parent=1 // loop_header
      %s26 = sphi 0, %s30
      %p27 = scmp.ge.s32.totalorder %s26, 4
      %s36 = sphi 0, %s38
      %s39 = sphi 0, %s36
      %s40 = sphi 0, %s39
      %s56 = sphi 0, %s40
      %s60 = sphi 0, %s60
      %s62 = sphi 0, %s60
      %s63 = sphi 0, %s62
      %s77 = sphi 0, %s63
      %s81 = sphi 0, %s81
      %s83 = sphi 0, %s81
      %s84 = sphi 0, %s83
      %s98 = sphi 0, %s84
      %s102 = sphi 0, %s102
      %s104 = sphi 0, %s102
      %s105 = sphi 0, %s104
      %s119 = sphi 0, %s105
      %s123 = sphi 0, %s123
      %s125 = sphi 0, %s123
      %s126 = sphi 0, %s125
      %s140 = sphi 0, %s126
      %s144 = sphi 0, %s144
      %s146 = sphi 0, %s144
      %s147 = sphi 0, %s146
      %s161 = sphi 0, %s147
      %s165 = sphi 0, %s165
      %s167 = sphi 0, %s165
      %s168 = sphi 0, %s167
      %s182 = sphi 0, %s168
      %s186 = sphi 0, %s186
      %s188 = sphi 0, %s186
      %s189 = sphi 0, %s188
      %s203 = sphi 0, %s189
      %s207 = sphi 0, %s207
      %s209 = sphi 0, %s207
      %s210 = sphi 0, %s209
      %s224 = sphi 0, %s210
      %s228 = sphi 0, %s228
      %s230 = sphi 0, %s228
      %s231 = sphi 0, %s230
      %s245 = sphi 0, %s231
      %s251 = sphi 0, %s253
      %s254 = sphi 0, %s251
      %s255 = sphi 0, %s254
      %s271 = sphi 0, %s255
    $region4: #{tpu_custom_call.1} parent=1 // loop_header_branch
      %29 = sbr.rel (%p27) target = $region8
    $region5: #{tpu_custom_call.1} parent=1 // loop_body
      %s31 = ssub.s32 %s26, 1
      %s32 = ssub.s32 %s26, 2
      %s33 = sadd.s32 %s26, 1
      %s34 = ssub.s32 %s26, %s33
      %p35 = scmp.eq.s32.totalorder %s34, 0
      %s37 = sadd.s32 %s36, 1
      %s38 = scalar_select %p35, %s36, %s37
      %p41 = pneg %p35
      %p42 = scmp.eq.s32.totalorder %s26, 1
      %p43 = por %p41, %p42
      %p44 = scmp.ne.s32.totalorder %s36, %s39
      %p45 = scmp.eq.s32.totalorder %s26, 0
      %p46 = por %p44, %p45
      %p47 = scmp.ne.s32.totalorder %s36, %s39
      %p48 = scmp.eq.s32.totalorder %s31, 1
      %p49 = por %p47, %p48
      %p50 = scmp.ne.s32.totalorder %s39, %s40
      %p51 = scmp.eq.s32.totalorder %s31, 0
      %p52 = por %p50, %p51
      %p53 = scmp.ne.s32.totalorder %s39, %s40
      %p54 = scmp.eq.s32.totalorder %s32, 1
      %p55 = por %p53, %p54
      %p57 = scmp.ne.s32.totalorder %s40, %s56
      %p58 = scmp.eq.s32.totalorder %s32, 0
      %p59 = por %p57, %p58
      %s61 = sadd.s32 %s60, 1
      %p64 = scmp.eq.s32.totalorder %s26, 1
      %p65 = scmp.ne.s32.totalorder %s60, %s62
      %p66 = scmp.eq.s32.totalorder %s26, 0
      %p67 = por %p65, %p66
      %p68 = scmp.ne.s32.totalorder %s60, %s62
      %p69 = scmp.eq.s32.totalorder %s31, 1
      %p70 = por %p68, %p69
      %p71 = scmp.ne.s32.totalorder %s62, %s63
      %p72 = scmp.eq.s32.totalorder %s31, 0
      %p73 = por %p71, %p72
      %p74 = scmp.ne.s32.totalorder %s62, %s63
      %p75 = scmp.eq.s32.totalorder %s32, 1
      %p76 = por %p74, %p75
      %p78 = scmp.ne.s32.totalorder %s63, %s77
      %p79 = scmp.eq.s32.totalorder %s32, 0
      %p80 = por %p78, %p79
      %s82 = sadd.s32 %s81, 1
      %p85 = scmp.eq.s32.totalorder %s26, 1
      %p86 = scmp.ne.s32.totalorder %s81, %s83
      %p87 = scmp.eq.s32.totalorder %s26, 0
      %p88 = por %p86, %p87
      %p89 = scmp.ne.s32.totalorder %s81, %s83
      %p90 = scmp.eq.s32.totalorder %s31, 1
      %p91 = por %p89, %p90
      %p92 = scmp.ne.s32.totalorder %s83, %s84
      %p93 = scmp.eq.s32.totalorder %s31, 0
      %p94 = por %p92, %p93
      %p95 = scmp.ne.s32.totalorder %s83, %s84
      %p96 = scmp.eq.s32.totalorder %s32, 1
      %p97 = por %p95, %p96
      %p99 = scmp.ne.s32.totalorder %s84, %s98
      %p100 = scmp.eq.s32.totalorder %s32, 0
      %p101 = por %p99, %p100
      %s103 = sadd.s32 %s102, 1
      %p106 = scmp.eq.s32.totalorder %s26, 1
      %p107 = scmp.ne.s32.totalorder %s102, %s104
      %p108 = scmp.eq.s32.totalorder %s26, 0
      %p109 = por %p107, %p108
      %p110 = scmp.ne.s32.totalorder %s102, %s104
      %p111 = scmp.eq.s32.totalorder %s31, 1
      %p112 = por %p110, %p111
      %p113 = scmp.ne.s32.totalorder %s104, %s105
      %p114 = scmp.eq.s32.totalorder %s31, 0
      %p115 = por %p113, %p114
      %p116 = scmp.ne.s32.totalorder %s104, %s105
      %p117 = scmp.eq.s32.totalorder %s32, 1
      %p118 = por %p116, %p117
      %p120 = scmp.ne.s32.totalorder %s105, %s119
      %p121 = scmp.eq.s32.totalorder %s32, 0
      %p122 = por %p120, %p121
      %s124 = sadd.s32 %s123, 1
      %p127 = scmp.eq.s32.totalorder %s26, 1
      %p128 = scmp.ne.s32.totalorder %s123, %s125
      %p129 = scmp.eq.s32.totalorder %s26, 0
      %p130 = por %p128, %p129
      %p131 = scmp.ne.s32.totalorder %s123, %s125
      %p132 = scmp.eq.s32.totalorder %s31, 1
      %p133 = por %p131, %p132
      %p134 = scmp.ne.s32.totalorder %s125, %s126
      %p135 = scmp.eq.s32.totalorder %s31, 0
      %p136 = por %p134, %p135
      %p137 = scmp.ne.s32.totalorder %s125, %s126
      %p138 = scmp.eq.s32.totalorder %s32, 1
      %p139 = por %p137, %p138
      %p141 = scmp.ne.s32.totalorder %s126, %s140
      %p142 = scmp.eq.s32.totalorder %s32, 0
      %p143 = por %p141, %p142
      %s145 = sadd.s32 %s144, 1
      %p148 = scmp.eq.s32.totalorder %s26, 1
      %p149 = scmp.ne.s32.totalorder %s144, %s146
      %p150 = scmp.eq.s32.totalorder %s26, 0
      %p151 = por %p149, %p150
      %p152 = scmp.ne.s32.totalorder %s144, %s146
      %p153 = scmp.eq.s32.totalorder %s31, 1
      %p154 = por %p152, %p153
      %p155 = scmp.ne.s32.totalorder %s146, %s147
      %p156 = scmp.eq.s32.totalorder %s31, 0
      %p157 = por %p155, %p156
      %p158 = scmp.ne.s32.totalorder %s146, %s147
      %p159 = scmp.eq.s32.totalorder %s32, 1
      %p160 = por %p158, %p159
      %p162 = scmp.ne.s32.totalorder %s147, %s161
      %p163 = scmp.eq.s32.totalorder %s32, 0
      %p164 = por %p162, %p163
      %s166 = sadd.s32 %s165, 1
      %p169 = scmp.eq.s32.totalorder %s26, 1
      %p170 = scmp.ne.s32.totalorder %s165, %s167
      %p171 = scmp.eq.s32.totalorder %s26, 0
      %p172 = por %p170, %p171
      %p173 = scmp.ne.s32.totalorder %s165, %s167
      %p174 = scmp.eq.s32.totalorder %s31, 1
      %p175 = por %p173, %p174
      %p176 = scmp.ne.s32.totalorder %s167, %s168
      %p177 = scmp.eq.s32.totalorder %s31, 0
      %p178 = por %p176, %p177
      %p179 = scmp.ne.s32.totalorder %s167, %s168
      %p180 = scmp.eq.s32.totalorder %s32, 1
      %p181 = por %p179, %p180
      %p183 = scmp.ne.s32.totalorder %s168, %s182
      %p184 = scmp.eq.s32.totalorder %s32, 0
      %p185 = por %p183, %p184
      %s187 = sadd.s32 %s186, 1
      %p190 = scmp.eq.s32.totalorder %s26, 1
      %p191 = scmp.ne.s32.totalorder %s186, %s188
      %p192 = scmp.eq.s32.totalorder %s26, 0
      %p193 = por %p191, %p192
      %p194 = scmp.ne.s32.totalorder %s186, %s188
      %p195 = scmp.eq.s32.totalorder %s31, 1
      %p196 = por %p194, %p195
      %p197 = scmp.ne.s32.totalorder %s188, %s189
      %p198 = scmp.eq.s32.totalorder %s31, 0
      %p199 = por %p197, %p198
      %p200 = scmp.ne.s32.totalorder %s188, %s189
      %p201 = scmp.eq.s32.totalorder %s32, 1
      %p202 = por %p200, %p201
      %p204 = scmp.ne.s32.totalorder %s189, %s203
      %p205 = scmp.eq.s32.totalorder %s32, 0
      %p206 = por %p204, %p205
      %s208 = sadd.s32 %s207, 1
      %p211 = scmp.eq.s32.totalorder %s26, 1
      %p212 = scmp.ne.s32.totalorder %s207, %s209
      %p213 = scmp.eq.s32.totalorder %s26, 0
      %p214 = por %p212, %p213
      %p215 = scmp.ne.s32.totalorder %s207, %s209
      %p216 = scmp.eq.s32.totalorder %s31, 1
      %p217 = por %p215, %p216
      %p218 = scmp.ne.s32.totalorder %s209, %s210
      %p219 = scmp.eq.s32.totalorder %s31, 0
      %p220 = por %p218, %p219
      %p221 = scmp.ne.s32.totalorder %s209, %s210
      %p222 = scmp.eq.s32.totalorder %s32, 1
      %p223 = por %p221, %p222
      %p225 = scmp.ne.s32.totalorder %s210, %s224
      %p226 = scmp.eq.s32.totalorder %s32, 0
      %p227 = por %p225, %p226
      %s229 = sadd.s32 %s228, 1
      %p232 = scmp.eq.s32.totalorder %s26, 1
      %p233 = scmp.ne.s32.totalorder %s228, %s230
      %p234 = scmp.eq.s32.totalorder %s26, 0
      %p235 = por %p233, %p234
      %p236 = scmp.ne.s32.totalorder %s228, %s230
      %p237 = scmp.eq.s32.totalorder %s31, 1
      %p238 = por %p236, %p237
      %p239 = scmp.ne.s32.totalorder %s230, %s231
      %p240 = scmp.eq.s32.totalorder %s31, 0
      %p241 = por %p239, %p240
      %p242 = scmp.ne.s32.totalorder %s230, %s231
      %p243 = scmp.eq.s32.totalorder %s32, 1
      %p244 = por %p242, %p243
      %p246 = scmp.ne.s32.totalorder %s231, %s245
      %p247 = scmp.eq.s32.totalorder %s32, 0
      %p248 = por %p246, %p247
      %s249 = ssub.s32 %s26, %s33
      %p250 = scmp.eq.s32.totalorder %s249, 0
      %s252 = sadd.s32 %s251, 1
      %s253 = scalar_select %p250, %s251, %s252
      %p256 = pneg %p250
      %p257 = scmp.eq.s32.totalorder %s26, 1
      %p258 = por %p256, %p257
      %p259 = scmp.ne.s32.totalorder %s251, %s254
      %p260 = scmp.eq.s32.totalorder %s26, 0
      %p261 = por %p259, %p260
      %p262 = scmp.ne.s32.totalorder %s251, %s254
      %p263 = scmp.eq.s32.totalorder %s31, 1
      %p264 = por %p262, %p263
      %p265 = scmp.ne.s32.totalorder %s254, %s255
      %p266 = scmp.eq.s32.totalorder %s31, 0
      %p267 = por %p265, %p266
      %p268 = scmp.ne.s32.totalorder %s254, %s255
      %p269 = scmp.eq.s32.totalorder %s32, 1
      %p270 = por %p268, %p269
      %p272 = scmp.ne.s32.totalorder %s255, %s271
      %p273 = scmp.eq.s32.totalorder %s32, 0
      %p274 = por %p272, %p273
      %p275 = scmp.le.s32.totalorder 1, %s26
      %p276 = scmp.lt.s32.totalorder %s26, 3
      %p277 = pnand %p275, %p276
      %p278 = pneg %p277
      // Predicated region
      $region9: #{tpu_custom_call.1} parent=5 // pred_check
        _
      $region10: #{tpu_custom_call.1} parent=5 // pred_check_branch
        %280 = sbr.rel (%p277) target = $region12
      $region11: #{tpu_custom_call.1} parent=5 // pred_region
        %s281 = ssub.s32 %s26, 1
        // Predicated region
        $region13: #{tpu_custom_call.1} parent=11 // pred_check
          %p282 = pneg %p73
        $region14: #{tpu_custom_call.1} parent=11 // pred_check_branch
          %284 = sbr.rel (%p282) target = $region16
        $region15: #{tpu_custom_call.1} parent=11 // pred_region
          %s286 = ssub.s32 256, 256
          %287 = vsyncadd [#allocation6], %s286
          %s288 = sshll.u32 [#allocation5], 4
          %s289 = int_to_ptr.vmem [resolvable:$true] %s288
          %294 = dma.hbm_to_vmem [thread:$0]  %s1, 256, %s289, [#allocation6], 128, 128, 8
        $region16: #{tpu_custom_call.1} parent=11 // pred_fallthru
          _
        // Predicated region
        $region17: #{tpu_custom_call.1} parent=11 // pred_check
          %p295 = pneg %p94
        $region18: #{tpu_custom_call.1} parent=11 // pred_check_branch
          %297 = sbr.rel (%p295) target = $region20
        $region19: #{tpu_custom_call.1} parent=11 // pred_region
          %s299 = ssub.s32 256, 256
          %300 = vsyncadd [#allocation6], %s299
          %s301 = sshll.u32 [#allocation7], 4
          %s302 = int_to_ptr.vmem [resolvable:$true] %s301
          %307 = dma.hbm_to_vmem [thread:$0]  %s2, 256, %s302, [#allocation6], 128, 128, 8
        $region20: #{tpu_custom_call.1} parent=11 // pred_fallthru
          _
        // Predicated region
        $region21: #{tpu_custom_call.1} parent=11 // pred_check
          %p308 = pneg %p115
        $region22: #{tpu_custom_call.1} parent=11 // pred_check_branch
          %310 = sbr.rel (%p308) target = $region24
        $region23: #{tpu_custom_call.1} parent=11 // pred_region
          %s312 = ssub.s32 256, 256
          %313 = vsyncadd [#allocation9], %s312
          %s314 = sshll.u32 [#allocation8], 4
          %s315 = int_to_ptr.vmem [resolvable:$true] %s314
          %320 = dma.hbm_to_vmem [thread:$0]  %s3, 256, %s315, [#allocation9], 128, 128, 8
        $region24: #{tpu_custom_call.1} parent=11 // pred_fallthru
          _
        // Predicated region
        $region25: #{tpu_custom_call.1} parent=11 // pred_check
          %p321 = pneg %p136
        $region26: #{tpu_custom_call.1} parent=11 // pred_check_branch
          %323 = sbr.rel (%p321) target = $region28
        $region27: #{tpu_custom_call.1} parent=11 // pred_region
          %s325 = ssub.s32 256, 256
          %326 = vsyncadd [#allocation9], %s325
          %s327 = sshll.u32 [#allocation10], 4
          %s328 = int_to_ptr.vmem [resolvable:$true] %s327
          %333 = dma.hbm_to_vmem [thread:$0]  %s4, 256, %s328, [#allocation9], 128, 128, 8
        $region28: #{tpu_custom_call.1} parent=11 // pred_fallthru
          _
        // Predicated region
        $region29: #{tpu_custom_call.1} parent=11 // pred_check
          %p334 = pneg %p157
        $region30: #{tpu_custom_call.1} parent=11 // pred_check_branch
          %336 = sbr.rel (%p334) target = $region32
        $region31: #{tpu_custom_call.1} parent=11 // pred_region
          _
        $region32: #{tpu_custom_call.1} parent=11 // pred_fallthru
          _
        // Predicated region
        $region33: #{tpu_custom_call.1} parent=11 // pred_check
          %p337 = pneg %p178
        $region34: #{tpu_custom_call.1} parent=11 // pred_check_branch
          %339 = sbr.rel (%p337) target = $region36
        $region35: #{tpu_custom_call.1} parent=11 // pred_region
          %s341 = ssub.s32 256, 256
          %342 = vsyncadd [#allocation12], %s341
          %s343 = sshll.u32 [#allocation11], 4
          %s344 = int_to_ptr.vmem [resolvable:$true] %s343
          %349 = dma.hbm_to_vmem [thread:$0]  %s6, 256, %s344, [#allocation12], 128, 128, 8
        $region36: #{tpu_custom_call.1} parent=11 // pred_fallthru
          _
        // Predicated region
        $region37: #{tpu_custom_call.1} parent=11 // pred_check
          %p350 = pneg %p199
        $region38: #{tpu_custom_call.1} parent=11 // pred_check_branch
          %352 = sbr.rel (%p350) target = $region40
        $region39: #{tpu_custom_call.1} parent=11 // pred_region
          %s354 = ssub.s32 256, 256
          %355 = vsyncadd [#allocation12], %s354
          %s356 = sshll.u32 [#allocation13], 4
          %s357 = int_to_ptr.vmem [resolvable:$true] %s356
          %362 = dma.hbm_to_vmem [thread:$0]  %s7, 256, %s357, [#allocation12], 128, 128, 8
        $region40: #{tpu_custom_call.1} parent=11 // pred_fallthru
          _
        // Predicated region
        $region41: #{tpu_custom_call.1} parent=11 // pred_check
          %p363 = pneg %p220
        $region42: #{tpu_custom_call.1} parent=11 // pred_check_branch
          %365 = sbr.rel (%p363) target = $region44
        $region43: #{tpu_custom_call.1} parent=11 // pred_region
          %s367 = ssub.s32 256, 256
          %368 = vsyncadd [#allocation15], %s367
          %s369 = sshll.u32 [#allocation14], 4
          %s370 = int_to_ptr.vmem [resolvable:$true] %s369
          %375 = dma.hbm_to_vmem [thread:$0]  %s8, 256, %s370, [#allocation15], 128, 128, 8
        $region44: #{tpu_custom_call.1} parent=11 // pred_fallthru
          _
        // Predicated region
        $region45: #{tpu_custom_call.1} parent=11 // pred_check
          %p376 = pneg %p241
        $region46: #{tpu_custom_call.1} parent=11 // pred_check_branch
          %378 = sbr.rel (%p376) target = $region48
        $region47: #{tpu_custom_call.1} parent=11 // pred_region
          _
        $region48: #{tpu_custom_call.1} parent=11 // pred_fallthru
          _
      $region12: #{tpu_custom_call.1} parent=5 // pred_fallthru
        _
      %p379 = scmp.lt.s32.totalorder %s26, 2
      // Predicated region
      $region49: #{tpu_custom_call.1} parent=5 // pred_check
        %p380 = pneg %p379
      $region50: #{tpu_custom_call.1} parent=5 // pred_check_branch
        %382 = sbr.rel (%p380) target = $region52
      $region51: #{tpu_custom_call.1} parent=5 // pred_region
        // Predicated region
        $region53: #{tpu_custom_call.1} parent=51 // pred_check
          %p383 = pneg %p46
        $region54: #{tpu_custom_call.1} parent=51 // pred_check_branch
          %385 = sbr.rel (%p383) target = $region56
        $region55: #{tpu_custom_call.1} parent=51 // pred_region
          %s386 = sand.u32 %s36, 1
          %s387 = scalar_lea.sflag [#allocation3], %s386
          %s388 = sand.u32 %s36, 1
          %s389 = smul.addr %s388, 16
          %s390 = scalar_lea.vmem [#allocation2], %s389
          %s392 = ssub.s32 256, 256
          %393 = vsyncadd %s387, %s392
          %s394 = smul.addr %s26, 2
          %s395 = smul.addr %s394, 128
          %s396 = scalar_lea.hbm %s0, %s395
          %s397 = sshll.u32 %s390, 4
          %s398 = int_to_ptr.vmem [resolvable:$true] %s397
          %403 = dma.hbm_to_vmem [thread:$0]  %s396, 256, %s398, %s387, 128, 128, 8
        $region56: #{tpu_custom_call.1} parent=51 // pred_fallthru
          _
      $region52: #{tpu_custom_call.1} parent=5 // pred_fallthru
        _
      %p404 = scmp.le.s32.totalorder 1, %s26
      %p405 = scmp.lt.s32.totalorder %s26, 3
      %p406 = pnand %p404, %p405
      %p407 = pneg %p406
      // Predicated region
      $region57: #{tpu_custom_call.1} parent=5 // pred_check
        _
      $region58: #{tpu_custom_call.1} parent=5 // pred_check_branch
        %409 = sbr.rel (%p406) target = $region60
      $region59: #{tpu_custom_call.1} parent=5 // pred_region
        %s410 = ssub.s32 %s26, 1
        %s411 = sand.u32 %s39, 1
        %s412 = scalar_lea.sflag [#allocation3], %s411
        %s413 = sand.u32 %s39, 1
        %s414 = smul.addr %s413, 16
        %s415 = scalar_lea.vmem [#allocation2], %s414
        // Predicated region
        $region61: #{tpu_custom_call.1} parent=59 // pred_check
          %p416 = pneg %p52
        $region62: #{tpu_custom_call.1} parent=59 // pred_check_branch
          %418 = sbr.rel (%p416) target = $region64
        $region63: #{tpu_custom_call.1} parent=59 // pred_region
          %419 = dma.done %s412, 256
        $region64: #{tpu_custom_call.1} parent=59 // pred_fallthru
          _
        // Predicated region
        $region65: #{tpu_custom_call.1} parent=59 // pred_check
          %p420 = pneg %p73
        $region66: #{tpu_custom_call.1} parent=59 // pred_check_branch
          %422 = sbr.rel (%p420) target = $region68
        $region67: #{tpu_custom_call.1} parent=59 // pred_region
          %423 = dma.done [#allocation6], 256
        $region68: #{tpu_custom_call.1} parent=59 // pred_fallthru
          _
        // Predicated region
        $region69: #{tpu_custom_call.1} parent=59 // pred_check
          %p424 = pneg %p94
        $region70: #{tpu_custom_call.1} parent=59 // pred_check_branch
          %426 = sbr.rel (%p424) target = $region72
        $region71: #{tpu_custom_call.1} parent=59 // pred_region
          %427 = dma.done [#allocation6], 256
        $region72: #{tpu_custom_call.1} parent=59 // pred_fallthru
          _
        // Predicated region
        $region73: #{tpu_custom_call.1} parent=59 // pred_check
          %p428 = pneg %p115
        $region74: #{tpu_custom_call.1} parent=59 // pred_check_branch
          %430 = sbr.rel (%p428) target = $region76
        $region75: #{tpu_custom_call.1} parent=59 // pred_region
          %431 = dma.done [#allocation9], 256
        $region76: #{tpu_custom_call.1} parent=59 // pred_fallthru
          _
        // Predicated region
        $region77: #{tpu_custom_call.1} parent=59 // pred_check
          %p432 = pneg %p136
        $region78: #{tpu_custom_call.1} parent=59 // pred_check_branch
          %434 = sbr.rel (%p432) target = $region80
        $region79: #{tpu_custom_call.1} parent=59 // pred_region
          %435 = dma.done [#allocation9], 256
        $region80: #{tpu_custom_call.1} parent=59 // pred_fallthru
          _
        // Predicated region
        $region81: #{tpu_custom_call.1} parent=59 // pred_check
          %p436 = pneg %p178
        $region82: #{tpu_custom_call.1} parent=59 // pred_check_branch
          %438 = sbr.rel (%p436) target = $region84
        $region83: #{tpu_custom_call.1} parent=59 // pred_region
          %439 = dma.done [#allocation12], 256
        $region84: #{tpu_custom_call.1} parent=59 // pred_fallthru
          _
        // Predicated region
        $region85: #{tpu_custom_call.1} parent=59 // pred_check
          %p440 = pneg %p199
        $region86: #{tpu_custom_call.1} parent=59 // pred_check_branch
          %442 = sbr.rel (%p440) target = $region88
        $region87: #{tpu_custom_call.1} parent=59 // pred_region
          %443 = dma.done [#allocation12], 256
        $region88: #{tpu_custom_call.1} parent=59 // pred_fallthru
          _
        // Predicated region
        $region89: #{tpu_custom_call.1} parent=59 // pred_check
          %p444 = pneg %p220
        $region90: #{tpu_custom_call.1} parent=59 // pred_check_branch
          %446 = sbr.rel (%p444) target = $region92
        $region91: #{tpu_custom_call.1} parent=59 // pred_region
          %447 = dma.done [#allocation15], 256
        $region92: #{tpu_custom_call.1} parent=59 // pred_fallthru
          _
        %s448 = sand.u32 %s39, 1
        %s449 = scalar_lea.sflag [#allocation3], %s448
        %s450 = sand.u32 %s39, 1
        %s451 = smul.addr %s450, 16
        %s452 = scalar_lea.vmem [#allocation2], %s451
        %p453 = pneg %p52
        %p454 = pneg %p49
        %p455 = pneg %p73
        %p456 = pneg %p70
        %p457 = pneg %p94
        %p458 = pneg %p91
        %p459 = pneg %p115
        %p460 = pneg %p112
        %p461 = pneg %p136
        %p462 = pneg %p133
        %p463 = pneg %p157
        %p464 = pneg %p154
        %p465 = pneg %p178
        %p466 = pneg %p175
        %p467 = pneg %p199
        %p468 = pneg %p196
        %p469 = pneg %p220
        %p470 = pneg %p217
        %p471 = pneg %p241
        %p472 = pneg %p238
        %p473 = pneg %p267
        %p474 = pneg %p264
        %s475 = sand.u32 %s254, 1
        %s476 = scalar_lea.sflag [#allocation4], %s475
        %s477 = sand.u32 %s254, 1
        %s478 = smul.addr %s477, 16
        %s479 = scalar_lea.vmem [#allocation16], %s478
        %v480 = vld [vmem:[%s415] sm:$0xff]
        %v481 = vld [vmem:[%s415 + $0x8] sm:$0xff]
        %v482 = vld [vmem:[#allocation5] sm:$0xff]
        %v483 = vld [vmem:[#allocation5 + $0x8] sm:$0xff]
        %v484 = vld [vmem:[#allocation7] sm:$0xff]
        %v485 = vld [vmem:[#allocation7 + $0x8] sm:$0xff]
        %vm486 = vcmask 130048
        %v488 = vsel %vm486, %v484, 0
        %v491 = vsel %vm486, %v485, 0
        %493 = vmatprep.subr.mxu0 0.0
        %494 = vmatpush1.msra.mxu0 %v480
        %495 = vmatprep.subr.mxu0 0.0
        %496 = vmatpush1.msra.mxu0 %v481
        %497 = vmatprep.subr.mxu0 0.0
        %498 = vmatpush1.msra.mxu0 0.0
        %499 = vmatprep.subr.mxu0 0.0
        %500 = vmatpush1.msra.mxu0 0.0
        %501 = vmatprep.subr.mxu0 0.0
        %502 = vmatpush1.msra.mxu0 0.0
        %503 = vmatprep.subr.mxu0 0.0
        %504 = vmatpush1.msra.mxu0 0.0
        %505 = vmatprep.subr.mxu0 0.0
        %506 = vmatpush1.msra.mxu0 0.0
        %507 = vmatprep.subr.mxu0 0.0
        %508 = vmatpush1.msra.mxu0 0.0
        %509 = vmatprep.subr.mxu0 0.0
        %510 = vmatpush1.msra.mxu0 0.0
        %511 = vmatprep.subr.mxu0 0.0
        %512 = vmatpush1.msra.mxu0 0.0
        %513 = vmatprep.subr.mxu0 0.0
        %514 = vmatpush1.msra.mxu0 0.0
        %515 = vmatprep.subr.mxu0 0.0
        %516 = vmatpush1.msra.mxu0 0.0
        %517 = vmatprep.subr.mxu0 0.0
        %518 = vmatpush1.msra.mxu0 0.0
        %519 = vmatprep.subr.mxu0 0.0
        %520 = vmatpush1.msra.mxu0 0.0
        %521 = vmatprep.subr.mxu0 0.0
        %522 = vmatpush1.msra.mxu0 0.0
        %523 = vmatprep.subr.mxu0 0.0
        %524 = vmatpush1.msra.mxu0 0.0
        %525 = vmatprep.subr.mxu0 0.0
        %526 = vmatpush1.msra.mxu0 0.0
        %527 = vmatprep.subr.mxu0 0.0
        %528 = vmatpush1.msra.mxu0 0.0
        %529 = vmatprep.subr.mxu0 0.0
        %530 = vmatpush1.msra.mxu0 0.0
        %531 = vmatprep.subr.mxu0 0.0
        %532 = vmatpush1.msra.mxu0 0.0
        %533 = vmatprep.subr.mxu0 0.0
        %534 = vmatpush1.msra.mxu0 0.0
        %535 = vmatprep.subr.mxu0 0.0
        %536 = vmatpush1.msra.mxu0 0.0
        %537 = vmatprep.subr.mxu0 0.0
        %538 = vmatpush1.msra.mxu0 0.0
        %539 = vmatprep.subr.mxu0 0.0
        %540 = vmatpush1.msra.mxu0 0.0
        %541 = vmatprep.subr.mxu0 0.0
        %542 = vmatpush1.msra.mxu0 0.0
        %543 = vmatprep.subr.mxu0 0.0
        %544 = vmatpush1.msra.mxu0 0.0
        %545 = vmatprep.subr.mxu0 0.0
        %546 = vmatpush1.msra.mxu0 0.0
        %547 = vmatprep.subr.mxu0 0.0
        %548 = vmatpush1.msra.mxu0 0.0
        %549 = vmatprep.subr.mxu0 0.0
        %550 = vmatpush1.msra.mxu0 0.0
        %551 = vmatprep.subr.mxu0 0.0
        %552 = vmatpush1.msra.mxu0 0.0
        %553 = vmatprep.subr.mxu0 0.0
        %554 = vmatpush1.msra.mxu0 0.0
        %555 = vmatprep.subr.mxu0 0.0
        %556 = vmatpush1.msra.mxu0 0.0
        %557 = vmatprep.mubr.f32.mxu0 0.0
        %558 = vmatmul.mubr.f32.gmra.mrb[0].mxu0 %v488
        %v559 = vpop.f32.mrb[0].mxu0
        %v560 = vadd.f32 0.0, %v559
        %v561 = vpop.f32.mrb[0].mxu0
        %562 = vmatprep.mubr.f32.mxu0 0.0
        %563 = vmatmul.mubr.f32.gmra.mrb[0].mxu0 %v491
        %v564 = vpop.f32.mrb[0].mxu0
        %v565 = vadd.f32 0.0, %v564
        %v566 = vpop.f32.mrb[0].mxu0
        %567 = vdwg.mxu0
        %v568 = vld [vmem:[#allocation8] sm:$0xff]
        %v569 = vld [vmem:[#allocation8 + $0x8] sm:$0xff]
        %v571 = vsel %vm486, %v568, 0
        %v574 = vsel %vm486, %v569, 0
        %576 = vmatprep.subr.mxu0 0.0
        %577 = vmatpush1.msra.mxu0 %v480
        %578 = vmatprep.subr.mxu0 0.0
        %579 = vmatpush1.msra.mxu0 %v481
        %580 = vmatprep.subr.mxu0 0.0
        %581 = vmatpush1.msra.mxu0 0.0
        %582 = vmatprep.subr.mxu0 0.0
        %583 = vmatpush1.msra.mxu0 0.0
        %584 = vmatprep.subr.mxu0 0.0
        %585 = vmatpush1.msra.mxu0 0.0
        %586 = vmatprep.subr.mxu0 0.0
        %587 = vmatpush1.msra.mxu0 0.0
        %588 = vmatprep.subr.mxu0 0.0
        %589 = vmatpush1.msra.mxu0 0.0
        %590 = vmatprep.subr.mxu0 0.0
        %591 = vmatpush1.msra.mxu0 0.0
        %592 = vmatprep.subr.mxu0 0.0
        %593 = vmatpush1.msra.mxu0 0.0
        %594 = vmatprep.subr.mxu0 0.0
        %595 = vmatpush1.msra.mxu0 0.0
        %596 = vmatprep.subr.mxu0 0.0
        %597 = vmatpush1.msra.mxu0 0.0
        %598 = vmatprep.subr.mxu0 0.0
        %599 = vmatpush1.msra.mxu0 0.0
        %600 = vmatprep.subr.mxu0 0.0
        %601 = vmatpush1.msra.mxu0 0.0
        %602 = vmatprep.subr.mxu0 0.0
        %603 = vmatpush1.msra.mxu0 0.0
        %604 = vmatprep.subr.mxu0 0.0
        %605 = vmatpush1.msra.mxu0 0.0
        %606 = vmatprep.subr.mxu0 0.0
        %607 = vmatpush1.msra.mxu0 0.0
        %608 = vmatprep.subr.mxu0 0.0
        %609 = vmatpush1.msra.mxu0 0.0
        %610 = vmatprep.subr.mxu0 0.0
        %611 = vmatpush1.msra.mxu0 0.0
        %612 = vmatprep.subr.mxu0 0.0
        %613 = vmatpush1.msra.mxu0 0.0
        %614 = vmatprep.subr.mxu0 0.0
        %615 = vmatpush1.msra.mxu0 0.0
        %616 = vmatprep.subr.mxu0 0.0
        %617 = vmatpush1.msra.mxu0 0.0
        %618 = vmatprep.subr.mxu0 0.0
        %619 = vmatpush1.msra.mxu0 0.0
        %620 = vmatprep.subr.mxu0 0.0
        %621 = vmatpush1.msra.mxu0 0.0
        %622 = vmatprep.subr.mxu0 0.0
        %623 = vmatpush1.msra.mxu0 0.0
        %624 = vmatprep.subr.mxu0 0.0
        %625 = vmatpush1.msra.mxu0 0.0
        %626 = vmatprep.subr.mxu0 0.0
        %627 = vmatpush1.msra.mxu0 0.0
        %628 = vmatprep.subr.mxu0 0.0
        %629 = vmatpush1.msra.mxu0 0.0
        %630 = vmatprep.subr.mxu0 0.0
        %631 = vmatpush1.msra.mxu0 0.0
        %632 = vmatprep.subr.mxu0 0.0
        %633 = vmatpush1.msra.mxu0 0.0
        %634 = vmatprep.subr.mxu0 0.0
        %635 = vmatpush1.msra.mxu0 0.0
        %636 = vmatprep.subr.mxu0 0.0
        %637 = vmatpush1.msra.mxu0 0.0
        %638 = vmatprep.subr.mxu0 0.0
        %639 = vmatpush1.msra.mxu0 0.0
        %640 = vmatprep.mubr.f32.mxu0 0.0
        %641 = vmatmul.mubr.f32.gmra.mrb[0].mxu0 %v571
        %v642 = vpop.f32.mrb[0].mxu0
        %v643 = vadd.f32 0.0, %v642
        %v644 = vpop.f32.mrb[0].mxu0
        %645 = vmatprep.mubr.f32.mxu0 0.0
        %646 = vmatmul.mubr.f32.gmra.mrb[0].mxu0 %v574
        %v647 = vpop.f32.mrb[0].mxu0
        %v648 = vadd.f32 0.0, %v647
        %v649 = vpop.f32.mrb[0].mxu0
        %650 = vdwg.mxu0
        %v651 = vld [vmem:[#allocation10] sm:$0xff]
        %v652 = vld [vmem:[#allocation10 + $0x8] sm:$0xff]
        %v654 = vsel %vm486, %v560, 0
        %v657 = vsel %vm486, %v565, 0
        %659 = vmatprep.subr.mxu0 0.0
        %660 = vmatpush1.msra.mxu0 %v651
        %661 = vmatprep.subr.mxu0 0.0
        %662 = vmatpush1.msra.mxu0 %v652
        %663 = vmatprep.subr.mxu0 0.0
        %664 = vmatpush1.msra.mxu0 0.0
        %665 = vmatprep.subr.mxu0 0.0
        %666 = vmatpush1.msra.mxu0 0.0
        %667 = vmatprep.subr.mxu0 0.0
        %668 = vmatpush1.msra.mxu0 0.0
        %669 = vmatprep.subr.mxu0 0.0
        %670 = vmatpush1.msra.mxu0 0.0
        %671 = vmatprep.subr.mxu0 0.0
        %672 = vmatpush1.msra.mxu0 0.0
        %673 = vmatprep.subr.mxu0 0.0
        %674 = vmatpush1.msra.mxu0 0.0
        %675 = vmatprep.subr.mxu0 0.0
        %676 = vmatpush1.msra.mxu0 0.0
        %677 = vmatprep.subr.mxu0 0.0
        %678 = vmatpush1.msra.mxu0 0.0
        %679 = vmatprep.subr.mxu0 0.0
        %680 = vmatpush1.msra.mxu0 0.0
        %681 = vmatprep.subr.mxu0 0.0
        %682 = vmatpush1.msra.mxu0 0.0
        %683 = vmatprep.subr.mxu0 0.0
        %684 = vmatpush1.msra.mxu0 0.0
        %685 = vmatprep.subr.mxu0 0.0
        %686 = vmatpush1.msra.mxu0 0.0
        %687 = vmatprep.subr.mxu0 0.0
        %688 = vmatpush1.msra.mxu0 0.0
        %689 = vmatprep.subr.mxu0 0.0
        %690 = vmatpush1.msra.mxu0 0.0
        %691 = vmatprep.subr.mxu0 0.0
        %692 = vmatpush1.msra.mxu0 0.0
        %693 = vmatprep.subr.mxu0 0.0
        %694 = vmatpush1.msra.mxu0 0.0
        %695 = vmatprep.subr.mxu0 0.0
        %696 = vmatpush1.msra.mxu0 0.0
        %697 = vmatprep.subr.mxu0 0.0
        %698 = vmatpush1.msra.mxu0 0.0
        %699 = vmatprep.subr.mxu0 0.0
        %700 = vmatpush1.msra.mxu0 0.0
        %701 = vmatprep.subr.mxu0 0.0
        %702 = vmatpush1.msra.mxu0 0.0
        %703 = vmatprep.subr.mxu0 0.0
        %704 = vmatpush1.msra.mxu0 0.0
        %705 = vmatprep.subr.mxu0 0.0
        %706 = vmatpush1.msra.mxu0 0.0
        %707 = vmatprep.subr.mxu0 0.0
        %708 = vmatpush1.msra.mxu0 0.0
        %709 = vmatprep.subr.mxu0 0.0
        %710 = vmatpush1.msra.mxu0 0.0
        %711 = vmatprep.subr.mxu0 0.0
        %712 = vmatpush1.msra.mxu0 0.0
        %713 = vmatprep.subr.mxu0 0.0
        %714 = vmatpush1.msra.mxu0 0.0
        %715 = vmatprep.subr.mxu0 0.0
        %716 = vmatpush1.msra.mxu0 0.0
        %717 = vmatprep.subr.mxu0 0.0
        %718 = vmatpush1.msra.mxu0 0.0
        %719 = vmatprep.subr.mxu0 0.0
        %720 = vmatpush1.msra.mxu0 0.0
        %721 = vmatprep.subr.mxu0 0.0
        %722 = vmatpush1.msra.mxu0 0.0
        %723 = vmatprep.mubr.f32.mxu0 0.0
        %724 = vmatmul.mubr.f32.gmra.mrb[0].mxu0 %v654
        %v725 = vpop.f32.mrb[0].mxu0
        %v726 = vadd.f32 0.0, %v725
        %v727 = vpop.f32.mrb[0].mxu0
        %728 = vmatprep.mubr.f32.mxu0 0.0
        %729 = vmatmul.mubr.f32.gmra.mrb[0].mxu0 %v657
        %v730 = vpop.f32.mrb[0].mxu0
        %v731 = vadd.f32 0.0, %v730
        %v732 = vpop.f32.mrb[0].mxu0
        %733 = vdwg.mxu0
        %v734 = vld [vmem:[%s5] sm:$0xff]
        %v735 = vld [vmem:[%s5 + $0x8] sm:$0xff]
        %v737 = vsel %vm486, %v643, 0
        %v740 = vsel %vm486, %v648, 0
        %742 = vmatprep.subr.mxu0 0.0
        %743 = vmatpush1.msra.mxu0 %v734
        %744 = vmatprep.subr.mxu0 0.0
        %745 = vmatpush1.msra.mxu0 %v735
        %746 = vmatprep.subr.mxu0 0.0
        %747 = vmatpush1.msra.mxu0 0.0
        %748 = vmatprep.subr.mxu0 0.0
        %749 = vmatpush1.msra.mxu0 0.0
        %750 = vmatprep.subr.mxu0 0.0
        %751 = vmatpush1.msra.mxu0 0.0
        %752 = vmatprep.subr.mxu0 0.0
        %753 = vmatpush1.msra.mxu0 0.0
        %754 = vmatprep.subr.mxu0 0.0
        %755 = vmatpush1.msra.mxu0 0.0
        %756 = vmatprep.subr.mxu0 0.0
        %757 = vmatpush1.msra.mxu0 0.0
        %758 = vmatprep.subr.mxu0 0.0
        %759 = vmatpush1.msra.mxu0 0.0
        %760 = vmatprep.subr.mxu0 0.0
        %761 = vmatpush1.msra.mxu0 0.0
        %762 = vmatprep.subr.mxu0 0.0
        %763 = vmatpush1.msra.mxu0 0.0
        %764 = vmatprep.subr.mxu0 0.0
        %765 = vmatpush1.msra.mxu0 0.0
        %766 = vmatprep.subr.mxu0 0.0
        %767 = vmatpush1.msra.mxu0 0.0
        %768 = vmatprep.subr.mxu0 0.0
        %769 = vmatpush1.msra.mxu0 0.0
        %770 = vmatprep.subr.mxu0 0.0
        %771 = vmatpush1.msra.mxu0 0.0
        %772 = vmatprep.subr.mxu0 0.0
        %773 = vmatpush1.msra.mxu0 0.0
        %774 = vmatprep.subr.mxu0 0.0
        %775 = vmatpush1.msra.mxu0 0.0
        %776 = vmatprep.subr.mxu0 0.0
        %777 = vmatpush1.msra.mxu0 0.0
        %778 = vmatprep.subr.mxu0 0.0
        %779 = vmatpush1.msra.mxu0 0.0
        %780 = vmatprep.subr.mxu0 0.0
        %781 = vmatpush1.msra.mxu0 0.0
        %782 = vmatprep.subr.mxu0 0.0
        %783 = vmatpush1.msra.mxu0 0.0
        %784 = vmatprep.subr.mxu0 0.0
        %785 = vmatpush1.msra.mxu0 0.0
        %786 = vmatprep.subr.mxu0 0.0
        %787 = vmatpush1.msra.mxu0 0.0
        %788 = vmatprep.subr.mxu0 0.0
        %789 = vmatpush1.msra.mxu0 0.0
        %790 = vmatprep.subr.mxu0 0.0
        %791 = vmatpush1.msra.mxu0 0.0
        %792 = vmatprep.subr.mxu0 0.0
        %793 = vmatpush1.msra.mxu0 0.0
        %794 = vmatprep.subr.mxu0 0.0
        %795 = vmatpush1.msra.mxu0 0.0
        %796 = vmatprep.subr.mxu0 0.0
        %797 = vmatpush1.msra.mxu0 0.0
        %798 = vmatprep.subr.mxu0 0.0
        %799 = vmatpush1.msra.mxu0 0.0
        %800 = vmatprep.subr.mxu0 0.0
        %801 = vmatpush1.msra.mxu0 0.0
        %802 = vmatprep.subr.mxu0 0.0
        %803 = vmatpush1.msra.mxu0 0.0
        %804 = vmatprep.subr.mxu0 0.0
        %805 = vmatpush1.msra.mxu0 0.0
        %806 = vmatprep.mubr.f32.mxu0 0.0
        %807 = vmatmul.mubr.f32.gmra.mrb[0].mxu0 %v737
        %v808 = vpop.f32.mrb[0].mxu0
        %v809 = vadd.f32 0.0, %v808
        %v810 = vpop.f32.mrb[0].mxu0
        %811 = vmatprep.mubr.f32.mxu0 0.0
        %812 = vmatmul.mubr.f32.gmra.mrb[0].mxu0 %v740
        %v813 = vpop.f32.mrb[0].mxu0
        %v814 = vadd.f32 0.0, %v813
        %v815 = vpop.f32.mrb[0].mxu0
        %816 = vdwg.mxu0
        %v817 = vsub.f32 %v726, %v809
        %v818 = vsub.f32 %v731, %v814
        %819 = vmatprep.subr.mxu0 0.0
        %820 = vmatpush1.msra.mxu0 %v651
        %821 = vmatprep.subr.mxu0 0.0
        %822 = vmatpush1.msra.mxu0 %v652
        %823 = vmatprep.subr.mxu0 0.0
        %824 = vmatpush1.msra.mxu0 0.0
        %825 = vmatprep.subr.mxu0 0.0
        %826 = vmatpush1.msra.mxu0 0.0
        %827 = vmatprep.subr.mxu0 0.0
        %828 = vmatpush1.msra.mxu0 0.0
        %829 = vmatprep.subr.mxu0 0.0
        %830 = vmatpush1.msra.mxu0 0.0
        %831 = vmatprep.subr.mxu0 0.0
        %832 = vmatpush1.msra.mxu0 0.0
        %833 = vmatprep.subr.mxu0 0.0
        %834 = vmatpush1.msra.mxu0 0.0
        %835 = vmatprep.subr.mxu0 0.0
        %836 = vmatpush1.msra.mxu0 0.0
        %837 = vmatprep.subr.mxu0 0.0
        %838 = vmatpush1.msra.mxu0 0.0
        %839 = vmatprep.subr.mxu0 0.0
        %840 = vmatpush1.msra.mxu0 0.0
        %841 = vmatprep.subr.mxu0 0.0
        %842 = vmatpush1.msra.mxu0 0.0
        %843 = vmatprep.subr.mxu0 0.0
        %844 = vmatpush1.msra.mxu0 0.0
        %845 = vmatprep.subr.mxu0 0.0
        %846 = vmatpush1.msra.mxu0 0.0
        %847 = vmatprep.subr.mxu0 0.0
        %848 = vmatpush1.msra.mxu0 0.0
        %849 = vmatprep.subr.mxu0 0.0
        %850 = vmatpush1.msra.mxu0 0.0
        %851 = vmatprep.subr.mxu0 0.0
        %852 = vmatpush1.msra.mxu0 0.0
        %853 = vmatprep.subr.mxu0 0.0
        %854 = vmatpush1.msra.mxu0 0.0
        %855 = vmatprep.subr.mxu0 0.0
        %856 = vmatpush1.msra.mxu0 0.0
        %857 = vmatprep.subr.mxu0 0.0
        %858 = vmatpush1.msra.mxu0 0.0
        %859 = vmatprep.subr.mxu0 0.0
        %860 = vmatpush1.msra.mxu0 0.0
        %861 = vmatprep.subr.mxu0 0.0
        %862 = vmatpush1.msra.mxu0 0.0
        %863 = vmatprep.subr.mxu0 0.0
        %864 = vmatpush1.msra.mxu0 0.0
        %865 = vmatprep.subr.mxu0 0.0
        %866 = vmatpush1.msra.mxu0 0.0
        %867 = vmatprep.subr.mxu0 0.0
        %868 = vmatpush1.msra.mxu0 0.0
        %869 = vmatprep.subr.mxu0 0.0
        %870 = vmatpush1.msra.mxu0 0.0
        %871 = vmatprep.subr.mxu0 0.0
        %872 = vmatpush1.msra.mxu0 0.0
        %873 = vmatprep.subr.mxu0 0.0
        %874 = vmatpush1.msra.mxu0 0.0
        %875 = vmatprep.subr.mxu0 0.0
        %876 = vmatpush1.msra.mxu0 0.0
        %877 = vmatprep.subr.mxu0 0.0
        %878 = vmatpush1.msra.mxu0 0.0
        %879 = vmatprep.subr.mxu0 0.0
        %880 = vmatpush1.msra.mxu0 0.0
        %881 = vmatprep.subr.mxu0 0.0
        %882 = vmatpush1.msra.mxu0 0.0
        %883 = vmatprep.mubr.f32.mxu0 0.0
        %884 = vmatmul.mubr.f32.gmra.mrb[0].mxu0 %v737
        %v885 = vpop.f32.mrb[0].mxu0
        %v886 = vadd.f32 0.0, %v885
        %v887 = vpop.f32.mrb[0].mxu0
        %888 = vmatprep.mubr.f32.mxu0 0.0
        %889 = vmatmul.mubr.f32.gmra.mrb[0].mxu0 %v740
        %v890 = vpop.f32.mrb[0].mxu0
        %v891 = vadd.f32 0.0, %v890
        %v892 = vpop.f32.mrb[0].mxu0
        %893 = vdwg.mxu0
        %894 = vmatprep.subr.mxu0 0.0
        %895 = vmatpush1.msra.mxu0 %v734
        %896 = vmatprep.subr.mxu0 0.0
        %897 = vmatpush1.msra.mxu0 %v735
        %898 = vmatprep.subr.mxu0 0.0
        %899 = vmatpush1.msra.mxu0 0.0
        %900 = vmatprep.subr.mxu0 0.0
        %901 = vmatpush1.msra.mxu0 0.0
        %902 = vmatprep.subr.mxu0 0.0
        %903 = vmatpush1.msra.mxu0 0.0
        %904 = vmatprep.subr.mxu0 0.0
        %905 = vmatpush1.msra.mxu0 0.0
        %906 = vmatprep.subr.mxu0 0.0
        %907 = vmatpush1.msra.mxu0 0.0
        %908 = vmatprep.subr.mxu0 0.0
        %909 = vmatpush1.msra.mxu0 0.0
        %910 = vmatprep.subr.mxu0 0.0
        %911 = vmatpush1.msra.mxu0 0.0
        %912 = vmatprep.subr.mxu0 0.0
        %913 = vmatpush1.msra.mxu0 0.0
        %914 = vmatprep.subr.mxu0 0.0
        %915 = vmatpush1.msra.mxu0 0.0
        %916 = vmatprep.subr.mxu0 0.0
        %917 = vmatpush1.msra.mxu0 0.0
        %918 = vmatprep.subr.mxu0 0.0
        %919 = vmatpush1.msra.mxu0 0.0
        %920 = vmatprep.subr.mxu0 0.0
        %921 = vmatpush1.msra.mxu0 0.0
        %922 = vmatprep.subr.mxu0 0.0
        %923 = vmatpush1.msra.mxu0 0.0
        %924 = vmatprep.subr.mxu0 0.0
        %925 = vmatpush1.msra.mxu0 0.0
        %926 = vmatprep.subr.mxu0 0.0
        %927 = vmatpush1.msra.mxu0 0.0
        %928 = vmatprep.subr.mxu0 0.0
        %929 = vmatpush1.msra.mxu0 0.0
        %930 = vmatprep.subr.mxu0 0.0
        %931 = vmatpush1.msra.mxu0 0.0
        %932 = vmatprep.subr.mxu0 0.0
        %933 = vmatpush1.msra.mxu0 0.0
        %934 = vmatprep.subr.mxu0 0.0
        %935 = vmatpush1.msra.mxu0 0.0
        %936 = vmatprep.subr.mxu0 0.0
        %937 = vmatpush1.msra.mxu0 0.0
        %938 = vmatprep.subr.mxu0 0.0
        %939 = vmatpush1.msra.mxu0 0.0
        %940 = vmatprep.subr.mxu0 0.0
        %941 = vmatpush1.msra.mxu0 0.0
        %942 = vmatprep.subr.mxu0 0.0
        %943 = vmatpush1.msra.mxu0 0.0
        %944 = vmatprep.subr.mxu0 0.0
        %945 = vmatpush1.msra.mxu0 0.0
        %946 = vmatprep.subr.mxu0 0.0
        %947 = vmatpush1.msra.mxu0 0.0
        %948 = vmatprep.subr.mxu0 0.0
        %949 = vmatpush1.msra.mxu0 0.0
        %950 = vmatprep.subr.mxu0 0.0
        %951 = vmatpush1.msra.mxu0 0.0
        %952 = vmatprep.subr.mxu0 0.0
        %953 = vmatpush1.msra.mxu0 0.0
        %954 = vmatprep.subr.mxu0 0.0
        %955 = vmatpush1.msra.mxu0 0.0
        %956 = vmatprep.subr.mxu0 0.0
        %957 = vmatpush1.msra.mxu0 0.0
        %958 = vmatprep.mubr.f32.mxu0 0.0
        %959 = vmatmul.mubr.f32.gmra.mrb[0].mxu0 %v654
        %v960 = vpop.f32.mrb[0].mxu0
        %v961 = vadd.f32 %v886, %v960
        %v962 = vpop.f32.mrb[0].mxu0
        %963 = vmatprep.mubr.f32.mxu0 0.0
        %964 = vmatmul.mubr.f32.gmra.mrb[0].mxu0 %v657
        %v965 = vpop.f32.mrb[0].mxu0
        %v966 = vadd.f32 %v891, %v965
        %v967 = vpop.f32.mrb[0].mxu0
        %968 = vdwg.mxu0
        %v969 = vmul.f32 %v817, %v482
        %v970 = vmul.f32 %v818, %v483
        %v971 = vmul.f32 %v961, %v482
        %v972 = vmul.f32 %v966, %v483
        %v973 = vld [vmem:[#allocation11] sm:$0xff]
        %v974 = vld [vmem:[#allocation11 + $0x8] sm:$0xff]
        %v976 = vsel %vm486, %v973, 0
        %v979 = vsel %vm486, %v974, 0
        %981 = vmatprep.subr.mxu0 0.0
        %982 = vmatpush1.msra.mxu0 %v969
        %983 = vmatprep.subr.mxu0 0.0
        %984 = vmatpush1.msra.mxu0 %v970
        %985 = vmatprep.subr.mxu0 0.0
        %986 = vmatpush1.msra.mxu0 0.0
        %987 = vmatprep.subr.mxu0 0.0
        %988 = vmatpush1.msra.mxu0 0.0
        %989 = vmatprep.subr.mxu0 0.0
        %990 = vmatpush1.msra.mxu0 0.0
        %991 = vmatprep.subr.mxu0 0.0
        %992 = vmatpush1.msra.mxu0 0.0
        %993 = vmatprep.subr.mxu0 0.0
        %994 = vmatpush1.msra.mxu0 0.0
        %995 = vmatprep.subr.mxu0 0.0
        %996 = vmatpush1.msra.mxu0 0.0
        %997 = vmatprep.subr.mxu0 0.0
        %998 = vmatpush1.msra.mxu0 0.0
        %999 = vmatprep.subr.mxu0 0.0
        %1000 = vmatpush1.msra.mxu0 0.0
        %1001 = vmatprep.subr.mxu0 0.0
        %1002 = vmatpush1.msra.mxu0 0.0
        %1003 = vmatprep.subr.mxu0 0.0
        %1004 = vmatpush1.msra.mxu0 0.0
        %1005 = vmatprep.subr.mxu0 0.0
        %1006 = vmatpush1.msra.mxu0 0.0
        %1007 = vmatprep.subr.mxu0 0.0
        %1008 = vmatpush1.msra.mxu0 0.0
        %1009 = vmatprep.subr.mxu0 0.0
        %1010 = vmatpush1.msra.mxu0 0.0
        %1011 = vmatprep.subr.mxu0 0.0
        %1012 = vmatpush1.msra.mxu0 0.0
        %1013 = vmatprep.subr.mxu0 0.0
        %1014 = vmatpush1.msra.mxu0 0.0
        %1015 = vmatprep.subr.mxu0 0.0
        %1016 = vmatpush1.msra.mxu0 0.0
        %1017 = vmatprep.subr.mxu0 0.0
        %1018 = vmatpush1.msra.mxu0 0.0
        %1019 = vmatprep.subr.mxu0 0.0
        %1020 = vmatpush1.msra.mxu0 0.0
        %1021 = vmatprep.subr.mxu0 0.0
        %1022 = vmatpush1.msra.mxu0 0.0
        %1023 = vmatprep.subr.mxu0 0.0
        %1024 = vmatpush1.msra.mxu0 0.0
        %1025 = vmatprep.subr.mxu0 0.0
        %1026 = vmatpush1.msra.mxu0 0.0
        %1027 = vmatprep.subr.mxu0 0.0
        %1028 = vmatpush1.msra.mxu0 0.0
        %1029 = vmatprep.subr.mxu0 0.0
        %1030 = vmatpush1.msra.mxu0 0.0
        %1031 = vmatprep.subr.mxu0 0.0
        %1032 = vmatpush1.msra.mxu0 0.0
        %1033 = vmatprep.subr.mxu0 0.0
        %1034 = vmatpush1.msra.mxu0 0.0
        %1035 = vmatprep.subr.mxu0 0.0
        %1036 = vmatpush1.msra.mxu0 0.0
        %1037 = vmatprep.subr.mxu0 0.0
        %1038 = vmatpush1.msra.mxu0 0.0
        %1039 = vmatprep.subr.mxu0 0.0
        %1040 = vmatpush1.msra.mxu0 0.0
        %1041 = vmatprep.subr.mxu0 0.0
        %1042 = vmatpush1.msra.mxu0 0.0
        %1043 = vmatprep.subr.mxu0 0.0
        %1044 = vmatpush1.msra.mxu0 0.0
        %1045 = vmatprep.mubr.f32.mxu0 0.0
        %1046 = vmatmul.mubr.f32.gmra.mrb[0].mxu0 %v976
        %v1047 = vpop.f32.mrb[0].mxu0
        %v1048 = vadd.f32 0.0, %v1047
        %v1049 = vpop.f32.mrb[0].mxu0
        %1050 = vmatprep.mubr.f32.mxu0 0.0
        %1051 = vmatmul.mubr.f32.gmra.mrb[0].mxu0 %v979
        %v1052 = vpop.f32.mrb[0].mxu0
        %v1053 = vadd.f32 0.0, %v1052
        %v1054 = vpop.f32.mrb[0].mxu0
        %1055 = vdwg.mxu0
        %v1056 = vld [vmem:[#allocation13] sm:$0xff]
        %v1057 = vld [vmem:[#allocation13 + $0x8] sm:$0xff]
        %v1059 = vsel %vm486, %v1056, 0
        %v1062 = vsel %vm486, %v1057, 0
        %1064 = vmatprep.subr.mxu0 0.0
        %1065 = vmatpush1.msra.mxu0 %v971
        %1066 = vmatprep.subr.mxu0 0.0
        %1067 = vmatpush1.msra.mxu0 %v972
        %1068 = vmatprep.subr.mxu0 0.0
        %1069 = vmatpush1.msra.mxu0 0.0
        %1070 = vmatprep.subr.mxu0 0.0
        %1071 = vmatpush1.msra.mxu0 0.0
        %1072 = vmatprep.subr.mxu0 0.0
        %1073 = vmatpush1.msra.mxu0 0.0
        %1074 = vmatprep.subr.mxu0 0.0
        %1075 = vmatpush1.msra.mxu0 0.0
        %1076 = vmatprep.subr.mxu0 0.0
        %1077 = vmatpush1.msra.mxu0 0.0
        %1078 = vmatprep.subr.mxu0 0.0
        %1079 = vmatpush1.msra.mxu0 0.0
        %1080 = vmatprep.subr.mxu0 0.0
        %1081 = vmatpush1.msra.mxu0 0.0
        %1082 = vmatprep.subr.mxu0 0.0
        %1083 = vmatpush1.msra.mxu0 0.0
        %1084 = vmatprep.subr.mxu0 0.0
        %1085 = vmatpush1.msra.mxu0 0.0
        %1086 = vmatprep.subr.mxu0 0.0
        %1087 = vmatpush1.msra.mxu0 0.0
        %1088 = vmatprep.subr.mxu0 0.0
        %1089 = vmatpush1.msra.mxu0 0.0
        %1090 = vmatprep.subr.mxu0 0.0
        %1091 = vmatpush1.msra.mxu0 0.0
        %1092 = vmatprep.subr.mxu0 0.0
        %1093 = vmatpush1.msra.mxu0 0.0
        %1094 = vmatprep.subr.mxu0 0.0
        %1095 = vmatpush1.msra.mxu0 0.0
        %1096 = vmatprep.subr.mxu0 0.0
        %1097 = vmatpush1.msra.mxu0 0.0
        %1098 = vmatprep.subr.mxu0 0.0
        %1099 = vmatpush1.msra.mxu0 0.0
        %1100 = vmatprep.subr.mxu0 0.0
        %1101 = vmatpush1.msra.mxu0 0.0
        %1102 = vmatprep.subr.mxu0 0.0
        %1103 = vmatpush1.msra.mxu0 0.0
        %1104 = vmatprep.subr.mxu0 0.0
        %1105 = vmatpush1.msra.mxu0 0.0
        %1106 = vmatprep.subr.mxu0 0.0
        %1107 = vmatpush1.msra.mxu0 0.0
        %1108 = vmatprep.subr.mxu0 0.0
        %1109 = vmatpush1.msra.mxu0 0.0
        %1110 = vmatprep.subr.mxu0 0.0
        %1111 = vmatpush1.msra.mxu0 0.0
        %1112 = vmatprep.subr.mxu0 0.0
        %1113 = vmatpush1.msra.mxu0 0.0
        %1114 = vmatprep.subr.mxu0 0.0
        %1115 = vmatpush1.msra.mxu0 0.0
        %1116 = vmatprep.subr.mxu0 0.0
        %1117 = vmatpush1.msra.mxu0 0.0
        %1118 = vmatprep.subr.mxu0 0.0
        %1119 = vmatpush1.msra.mxu0 0.0
        %1120 = vmatprep.subr.mxu0 0.0
        %1121 = vmatpush1.msra.mxu0 0.0
        %1122 = vmatprep.subr.mxu0 0.0
        %1123 = vmatpush1.msra.mxu0 0.0
        %1124 = vmatprep.subr.mxu0 0.0
        %1125 = vmatpush1.msra.mxu0 0.0
        %1126 = vmatprep.subr.mxu0 0.0
        %1127 = vmatpush1.msra.mxu0 0.0
        %1128 = vmatprep.mubr.f32.mxu0 0.0
        %1129 = vmatmul.mubr.f32.gmra.mrb[0].mxu0 %v1059
        %v1130 = vpop.f32.mrb[0].mxu0
        %v1131 = vadd.f32 0.0, %v1130
        %v1132 = vpop.f32.mrb[0].mxu0
        %1133 = vmatprep.mubr.f32.mxu0 0.0
        %1134 = vmatmul.mubr.f32.gmra.mrb[0].mxu0 %v1062
        %v1135 = vpop.f32.mrb[0].mxu0
        %v1136 = vadd.f32 0.0, %v1135
        %v1137 = vpop.f32.mrb[0].mxu0
        %1138 = vdwg.mxu0
        %v1139 = vsub.f32 %v1048, %v1131
        %v1140 = vsub.f32 %v1053, %v1136
        %1141 = vmatprep.subr.mxu0 0.0
        %1142 = vmatpush1.msra.mxu0 %v969
        %1143 = vmatprep.subr.mxu0 0.0
        %1144 = vmatpush1.msra.mxu0 %v970
        %1145 = vmatprep.subr.mxu0 0.0
        %1146 = vmatpush1.msra.mxu0 0.0
        %1147 = vmatprep.subr.mxu0 0.0
        %1148 = vmatpush1.msra.mxu0 0.0
        %1149 = vmatprep.subr.mxu0 0.0
        %1150 = vmatpush1.msra.mxu0 0.0
        %1151 = vmatprep.subr.mxu0 0.0
        %1152 = vmatpush1.msra.mxu0 0.0
        %1153 = vmatprep.subr.mxu0 0.0
        %1154 = vmatpush1.msra.mxu0 0.0
        %1155 = vmatprep.subr.mxu0 0.0
        %1156 = vmatpush1.msra.mxu0 0.0
        %1157 = vmatprep.subr.mxu0 0.0
        %1158 = vmatpush1.msra.mxu0 0.0
        %1159 = vmatprep.subr.mxu0 0.0
        %1160 = vmatpush1.msra.mxu0 0.0
        %1161 = vmatprep.subr.mxu0 0.0
        %1162 = vmatpush1.msra.mxu0 0.0
        %1163 = vmatprep.subr.mxu0 0.0
        %1164 = vmatpush1.msra.mxu0 0.0
        %1165 = vmatprep.subr.mxu0 0.0
        %1166 = vmatpush1.msra.mxu0 0.0
        %1167 = vmatprep.subr.mxu0 0.0
        %1168 = vmatpush1.msra.mxu0 0.0
        %1169 = vmatprep.subr.mxu0 0.0
        %1170 = vmatpush1.msra.mxu0 0.0
        %1171 = vmatprep.subr.mxu0 0.0
        %1172 = vmatpush1.msra.mxu0 0.0
        %1173 = vmatprep.subr.mxu0 0.0
        %1174 = vmatpush1.msra.mxu0 0.0
        %1175 = vmatprep.subr.mxu0 0.0
        %1176 = vmatpush1.msra.mxu0 0.0
        %1177 = vmatprep.subr.mxu0 0.0
        %1178 = vmatpush1.msra.mxu0 0.0
        %1179 = vmatprep.subr.mxu0 0.0
        %1180 = vmatpush1.msra.mxu0 0.0
        %1181 = vmatprep.subr.mxu0 0.0
        %1182 = vmatpush1.msra.mxu0 0.0
        %1183 = vmatprep.subr.mxu0 0.0
        %1184 = vmatpush1.msra.mxu0 0.0
        %1185 = vmatprep.subr.mxu0 0.0
        %1186 = vmatpush1.msra.mxu0 0.0
        %1187 = vmatprep.subr.mxu0 0.0
        %1188 = vmatpush1.msra.mxu0 0.0
        %1189 = vmatprep.subr.mxu0 0.0
        %1190 = vmatpush1.msra.mxu0 0.0
        %1191 = vmatprep.subr.mxu0 0.0
        %1192 = vmatpush1.msra.mxu0 0.0
        %1193 = vmatprep.subr.mxu0 0.0
        %1194 = vmatpush1.msra.mxu0 0.0
        %1195 = vmatprep.subr.mxu0 0.0
        %1196 = vmatpush1.msra.mxu0 0.0
        %1197 = vmatprep.subr.mxu0 0.0
        %1198 = vmatpush1.msra.mxu0 0.0
        %1199 = vmatprep.subr.mxu0 0.0
        %1200 = vmatpush1.msra.mxu0 0.0
        %1201 = vmatprep.subr.mxu0 0.0
        %1202 = vmatpush1.msra.mxu0 0.0
        %1203 = vmatprep.subr.mxu0 0.0
        %1204 = vmatpush1.msra.mxu0 0.0
        %1205 = vmatprep.mubr.f32.mxu0 0.0
        %1206 = vmatmul.mubr.f32.gmra.mrb[0].mxu0 %v1059
        %v1207 = vpop.f32.mrb[0].mxu0
        %v1208 = vadd.f32 0.0, %v1207
        %v1209 = vpop.f32.mrb[0].mxu0
        %1210 = vmatprep.mubr.f32.mxu0 0.0
        %1211 = vmatmul.mubr.f32.gmra.mrb[0].mxu0 %v1062
        %v1212 = vpop.f32.mrb[0].mxu0
        %v1213 = vadd.f32 0.0, %v1212
        %v1214 = vpop.f32.mrb[0].mxu0
        %1215 = vdwg.mxu0
        %1216 = vmatprep.subr.mxu0 0.0
        %1217 = vmatpush1.msra.mxu0 %v971
        %1218 = vmatprep.subr.mxu0 0.0
        %1219 = vmatpush1.msra.mxu0 %v972
        %1220 = vmatprep.subr.mxu0 0.0
        %1221 = vmatpush1.msra.mxu0 0.0
        %1222 = vmatprep.subr.mxu0 0.0
        %1223 = vmatpush1.msra.mxu0 0.0
        %1224 = vmatprep.subr.mxu0 0.0
        %1225 = vmatpush1.msra.mxu0 0.0
        %1226 = vmatprep.subr.mxu0 0.0
        %1227 = vmatpush1.msra.mxu0 0.0
        %1228 = vmatprep.subr.mxu0 0.0
        %1229 = vmatpush1.msra.mxu0 0.0
        %1230 = vmatprep.subr.mxu0 0.0
        %1231 = vmatpush1.msra.mxu0 0.0
        %1232 = vmatprep.subr.mxu0 0.0
        %1233 = vmatpush1.msra.mxu0 0.0
        %1234 = vmatprep.subr.mxu0 0.0
        %1235 = vmatpush1.msra.mxu0 0.0
        %1236 = vmatprep.subr.mxu0 0.0
        %1237 = vmatpush1.msra.mxu0 0.0
        %1238 = vmatprep.subr.mxu0 0.0
        %1239 = vmatpush1.msra.mxu0 0.0
        %1240 = vmatprep.subr.mxu0 0.0
        %1241 = vmatpush1.msra.mxu0 0.0
        %1242 = vmatprep.subr.mxu0 0.0
        %1243 = vmatpush1.msra.mxu0 0.0
        %1244 = vmatprep.subr.mxu0 0.0
        %1245 = vmatpush1.msra.mxu0 0.0
        %1246 = vmatprep.subr.mxu0 0.0
        %1247 = vmatpush1.msra.mxu0 0.0
        %1248 = vmatprep.subr.mxu0 0.0
        %1249 = vmatpush1.msra.mxu0 0.0
        %1250 = vmatprep.subr.mxu0 0.0
        %1251 = vmatpush1.msra.mxu0 0.0
        %1252 = vmatprep.subr.mxu0 0.0
        %1253 = vmatpush1.msra.mxu0 0.0
        %1254 = vmatprep.subr.mxu0 0.0
        %1255 = vmatpush1.msra.mxu0 0.0
        %1256 = vmatprep.subr.mxu0 0.0
        %1257 = vmatpush1.msra.mxu0 0.0
        %1258 = vmatprep.subr.mxu0 0.0
        %1259 = vmatpush1.msra.mxu0 0.0
        %1260 = vmatprep.subr.mxu0 0.0
        %1261 = vmatpush1.msra.mxu0 0.0
        %1262 = vmatprep.subr.mxu0 0.0
        %1263 = vmatpush1.msra.mxu0 0.0
        %1264 = vmatprep.subr.mxu0 0.0
        %1265 = vmatpush1.msra.mxu0 0.0
        %1266 = vmatprep.subr.mxu0 0.0
        %1267 = vmatpush1.msra.mxu0 0.0
        %1268 = vmatprep.subr.mxu0 0.0
        %1269 = vmatpush1.msra.mxu0 0.0
        %1270 = vmatprep.subr.mxu0 0.0
        %1271 = vmatpush1.msra.mxu0 0.0
        %1272 = vmatprep.subr.mxu0 0.0
        %1273 = vmatpush1.msra.mxu0 0.0
        %1274 = vmatprep.subr.mxu0 0.0
        %1275 = vmatpush1.msra.mxu0 0.0
        %1276 = vmatprep.subr.mxu0 0.0
        %1277 = vmatpush1.msra.mxu0 0.0
        %1278 = vmatprep.subr.mxu0 0.0
        %1279 = vmatpush1.msra.mxu0 0.0
        %1280 = vmatprep.mubr.f32.mxu0 0.0
        %1281 = vmatmul.mubr.f32.gmra.mrb[0].mxu0 %v976
        %v1282 = vpop.f32.mrb[0].mxu0
        %v1283 = vadd.f32 %v1208, %v1282
        %v1284 = vpop.f32.mrb[0].mxu0
        %1285 = vmatprep.mubr.f32.mxu0 0.0
        %1286 = vmatmul.mubr.f32.gmra.mrb[0].mxu0 %v979
        %v1287 = vpop.f32.mrb[0].mxu0
        %v1288 = vadd.f32 %v1213, %v1287
        %v1289 = vpop.f32.mrb[0].mxu0
        %1290 = vdwg.mxu0
        %v1291 = vld [vmem:[#allocation14] sm:$0xff]
        %v1292 = vld [vmem:[#allocation14 + $0x8] sm:$0xff]
        %v1294 = vsel %vm486, %v1139, 0
        %v1297 = vsel %vm486, %v1140, 0
        %1299 = vmatprep.subr.mxu0 0.0
        %1300 = vmatpush1.msra.mxu0 %v1291
        %1301 = vmatprep.subr.mxu0 0.0
        %1302 = vmatpush1.msra.mxu0 %v1292
        %1303 = vmatprep.subr.mxu0 0.0
        %1304 = vmatpush1.msra.mxu0 0.0
        %1305 = vmatprep.subr.mxu0 0.0
        %1306 = vmatpush1.msra.mxu0 0.0
        %1307 = vmatprep.subr.mxu0 0.0
        %1308 = vmatpush1.msra.mxu0 0.0
        %1309 = vmatprep.subr.mxu0 0.0
        %1310 = vmatpush1.msra.mxu0 0.0
        %1311 = vmatprep.subr.mxu0 0.0
        %1312 = vmatpush1.msra.mxu0 0.0
        %1313 = vmatprep.subr.mxu0 0.0
        %1314 = vmatpush1.msra.mxu0 0.0
        %1315 = vmatprep.subr.mxu0 0.0
        %1316 = vmatpush1.msra.mxu0 0.0
        %1317 = vmatprep.subr.mxu0 0.0
        %1318 = vmatpush1.msra.mxu0 0.0
        %1319 = vmatprep.subr.mxu0 0.0
        %1320 = vmatpush1.msra.mxu0 0.0
        %1321 = vmatprep.subr.mxu0 0.0
        %1322 = vmatpush1.msra.mxu0 0.0
        %1323 = vmatprep.subr.mxu0 0.0
        %1324 = vmatpush1.msra.mxu0 0.0
        %1325 = vmatprep.subr.mxu0 0.0
        %1326 = vmatpush1.msra.mxu0 0.0
        %1327 = vmatprep.subr.mxu0 0.0
        %1328 = vmatpush1.msra.mxu0 0.0
        %1329 = vmatprep.subr.mxu0 0.0
        %1330 = vmatpush1.msra.mxu0 0.0
        %1331 = vmatprep.subr.mxu0 0.0
        %1332 = vmatpush1.msra.mxu0 0.0
        %1333 = vmatprep.subr.mxu0 0.0
        %1334 = vmatpush1.msra.mxu0 0.0
        %1335 = vmatprep.subr.mxu0 0.0
        %1336 = vmatpush1.msra.mxu0 0.0
        %1337 = vmatprep.subr.mxu0 0.0
        %1338 = vmatpush1.msra.mxu0 0.0
        %1339 = vmatprep.subr.mxu0 0.0
        %1340 = vmatpush1.msra.mxu0 0.0
        %1341 = vmatprep.subr.mxu0 0.0
        %1342 = vmatpush1.msra.mxu0 0.0
        %1343 = vmatprep.subr.mxu0 0.0
        %1344 = vmatpush1.msra.mxu0 0.0
        %1345 = vmatprep.subr.mxu0 0.0
        %1346 = vmatpush1.msra.mxu0 0.0
        %1347 = vmatprep.subr.mxu0 0.0
        %1348 = vmatpush1.msra.mxu0 0.0
        %1349 = vmatprep.subr.mxu0 0.0
        %1350 = vmatpush1.msra.mxu0 0.0
        %1351 = vmatprep.subr.mxu0 0.0
        %1352 = vmatpush1.msra.mxu0 0.0
        %1353 = vmatprep.subr.mxu0 0.0
        %1354 = vmatpush1.msra.mxu0 0.0
        %1355 = vmatprep.subr.mxu0 0.0
        %1356 = vmatpush1.msra.mxu0 0.0
        %1357 = vmatprep.subr.mxu0 0.0
        %1358 = vmatpush1.msra.mxu0 0.0
        %1359 = vmatprep.subr.mxu0 0.0
        %1360 = vmatpush1.msra.mxu0 0.0
        %1361 = vmatprep.subr.mxu0 0.0
        %1362 = vmatpush1.msra.mxu0 0.0
        %1363 = vmatprep.mubr.f32.mxu0 0.0
        %1364 = vmatmul.mubr.f32.gmra.mrb[0].mxu0 %v1294
        %v1365 = vpop.f32.mrb[0].mxu0
        %v1366 = vadd.f32 0.0, %v1365
        %v1367 = vpop.f32.mrb[0].mxu0
        %1368 = vmatprep.mubr.f32.mxu0 0.0
        %1369 = vmatmul.mubr.f32.gmra.mrb[0].mxu0 %v1297
        %v1370 = vpop.f32.mrb[0].mxu0
        %v1371 = vadd.f32 0.0, %v1370
        %v1372 = vpop.f32.mrb[0].mxu0
        %1373 = vdwg.mxu0
        %v1374 = vld [vmem:[%s9] sm:$0xff]
        %v1375 = vld [vmem:[%s9 + $0x8] sm:$0xff]
        %v1377 = vsel %vm486, %v1283, 0
        %v1380 = vsel %vm486, %v1288, 0
        %1382 = vmatprep.subr.mxu0 0.0
        %1383 = vmatpush1.msra.mxu0 %v1374
        %1384 = vmatprep.subr.mxu0 0.0
        %1385 = vmatpush1.msra.mxu0 %v1375
        %1386 = vmatprep.subr.mxu0 0.0
        %1387 = vmatpush1.msra.mxu0 0.0
        %1388 = vmatprep.subr.mxu0 0.0
        %1389 = vmatpush1.msra.mxu0 0.0
        %1390 = vmatprep.subr.mxu0 0.0
        %1391 = vmatpush1.msra.mxu0 0.0
        %1392 = vmatprep.subr.mxu0 0.0
        %1393 = vmatpush1.msra.mxu0 0.0
        %1394 = vmatprep.subr.mxu0 0.0
        %1395 = vmatpush1.msra.mxu0 0.0
        %1396 = vmatprep.subr.mxu0 0.0
        %1397 = vmatpush1.msra.mxu0 0.0
        %1398 = vmatprep.subr.mxu0 0.0
        %1399 = vmatpush1.msra.mxu0 0.0
        %1400 = vmatprep.subr.mxu0 0.0
        %1401 = vmatpush1.msra.mxu0 0.0
        %1402 = vmatprep.subr.mxu0 0.0
        %1403 = vmatpush1.msra.mxu0 0.0
        %1404 = vmatprep.subr.mxu0 0.0
        %1405 = vmatpush1.msra.mxu0 0.0
        %1406 = vmatprep.subr.mxu0 0.0
        %1407 = vmatpush1.msra.mxu0 0.0
        %1408 = vmatprep.subr.mxu0 0.0
        %1409 = vmatpush1.msra.mxu0 0.0
        %1410 = vmatprep.subr.mxu0 0.0
        %1411 = vmatpush1.msra.mxu0 0.0
        %1412 = vmatprep.subr.mxu0 0.0
        %1413 = vmatpush1.msra.mxu0 0.0
        %1414 = vmatprep.subr.mxu0 0.0
        %1415 = vmatpush1.msra.mxu0 0.0
        %1416 = vmatprep.subr.mxu0 0.0
        %1417 = vmatpush1.msra.mxu0 0.0
        %1418 = vmatprep.subr.mxu0 0.0
        %1419 = vmatpush1.msra.mxu0 0.0
        %1420 = vmatprep.subr.mxu0 0.0
        %1421 = vmatpush1.msra.mxu0 0.0
        %1422 = vmatprep.subr.mxu0 0.0
        %1423 = vmatpush1.msra.mxu0 0.0
        %1424 = vmatprep.subr.mxu0 0.0
        %1425 = vmatpush1.msra.mxu0 0.0
        %1426 = vmatprep.subr.mxu0 0.0
        %1427 = vmatpush1.msra.mxu0 0.0
        %1428 = vmatprep.subr.mxu0 0.0
        %1429 = vmatpush1.msra.mxu0 0.0
        %1430 = vmatprep.subr.mxu0 0.0
        %1431 = vmatpush1.msra.mxu0 0.0
        %1432 = vmatprep.subr.mxu0 0.0
        %1433 = vmatpush1.msra.mxu0 0.0
        %1434 = vmatprep.subr.mxu0 0.0
        %1435 = vmatpush1.msra.mxu0 0.0
        %1436 = vmatprep.subr.mxu0 0.0
        %1437 = vmatpush1.msra.mxu0 0.0
        %1438 = vmatprep.subr.mxu0 0.0
        %1439 = vmatpush1.msra.mxu0 0.0
        %1440 = vmatprep.subr.mxu0 0.0
        %1441 = vmatpush1.msra.mxu0 0.0
        %1442 = vmatprep.subr.mxu0 0.0
        %1443 = vmatpush1.msra.mxu0 0.0
        %1444 = vmatprep.subr.mxu0 0.0
        %1445 = vmatpush1.msra.mxu0 0.0
        %1446 = vmatprep.mubr.f32.mxu0 0.0
        %1447 = vmatmul.mubr.f32.gmra.mrb[0].mxu0 %v1377
        %v1448 = vpop.f32.mrb[0].mxu0
        %v1449 = vadd.f32 0.0, %v1448
        %v1450 = vpop.f32.mrb[0].mxu0
        %1451 = vmatprep.mubr.f32.mxu0 0.0
        %1452 = vmatmul.mubr.f32.gmra.mrb[0].mxu0 %v1380
        %v1453 = vpop.f32.mrb[0].mxu0
        %v1454 = vadd.f32 0.0, %v1453
        %v1455 = vpop.f32.mrb[0].mxu0
        %1456 = vdwg.mxu0
        %v1457 = vsub.f32 %v1366, %v1449
        %v1458 = vsub.f32 %v1371, %v1454
        %1459 = vst.msk [vmem:[%s479] sm:$0xff] %vm486, %v1457
        %1460 = vst.msk [vmem:[%s479 + $0x8] sm:$0xff] %vm486, %v1458
        %s1461 = sand.u32 %s254, 1
        %s1462 = scalar_lea.sflag [#allocation4], %s1461
        %s1463 = sand.u32 %s254, 1
        %s1464 = smul.addr %s1463, 16
        %s1465 = scalar_lea.vmem [#allocation16], %s1464
        // Predicated region
        $region93: #{tpu_custom_call.1} parent=59 // pred_check
          %p1466 = pneg %p264
        $region94: #{tpu_custom_call.1} parent=59 // pred_check_branch
          %1468 = sbr.rel (%p1466) target = $region96
        $region95: #{tpu_custom_call.1} parent=59 // pred_region
          %s1470 = ssub.s32 256, 256
          %1471 = vsyncadd %s1462, %s1470
          %s1472 = smul.addr %s31, 2
          %s1473 = smul.addr %s1472, 128
          %s1474 = scalar_lea.hbm %s10, %s1473
          %s1475 = sshll.u32 %s1465, 4
          %s1476 = int_to_ptr.vmem [resolvable:$true] %s1475
          %1481 = dma.vmem_to_hbm [thread:$0]  %s1476, 256, %s1474, %s1462, 128, 128, 8
        $region96: #{tpu_custom_call.1} parent=59 // pred_fallthru
          _
      $region60: #{tpu_custom_call.1} parent=5 // pred_fallthru
        _
      %p1482 = scmp.le.s32.totalorder 2, %s26
      // Predicated region
      $region97: #{tpu_custom_call.1} parent=5 // pred_check
        %p1483 = pneg %p1482
      $region98: #{tpu_custom_call.1} parent=5 // pred_check_branch
        %1485 = sbr.rel (%p1483) target = $region100
      $region99: #{tpu_custom_call.1} parent=5 // pred_region
        %s1486 = ssub.s32 %s26, 2
        // Predicated region
        $region101: #{tpu_custom_call.1} parent=99 // pred_check
          %p1487 = pneg %p270
        $region102: #{tpu_custom_call.1} parent=99 // pred_check_branch
          %1489 = sbr.rel (%p1487) target = $region104
        $region103: #{tpu_custom_call.1} parent=99 // pred_region
          %s1490 = sand.u32 %s255, 1
          %s1491 = scalar_lea.sflag [#allocation4], %s1490
          %s1492 = sand.u32 %s255, 1
          %s1493 = smul.addr %s1492, 16
          %s1494 = scalar_lea.vmem [#allocation16], %s1493
          %1495 = dma.done %s1491, 256
        $region104: #{tpu_custom_call.1} parent=99 // pred_fallthru
          _
      $region100: #{tpu_custom_call.1} parent=5 // pred_fallthru
        _
    $region6: #{tpu_custom_call.1} parent=1 // loop_footer
      %s30 = sadd.s32 1, %s26
    $region7: #{tpu_custom_call.1} parent=1 // loop_footer_branch
      %25 = sbr.rel target = $region3
    $region8: #{tpu_custom_call.1} parent=1 // loop_exit
      _
    %1496 = vsyncpa [#allocation3], 1
    %s1497 = scalar_lea.sflag [#allocation3], 1
    %1498 = vsyncpa %s1497, 1
    %1499 = vsyncpa [#allocation6], 1
    %1500 = vsyncpa [#allocation9], 1
    %1501 = vsyncpa [#allocation12], 1
    %1502 = vsyncpa [#allocation15], 1
    %1503 = vsyncpa [#allocation4], 1
    %s1504 = scalar_lea.sflag [#allocation4], 1
    %1505 = vsyncpa %s1504, 1

</llo_original>
